<compile_context>
chip_gen: v7x
topology: tpu7x:2x2x1
jax: 0.10.0
libtpu: 0.0.40
codegen_flags: <defaults>
</compile_context>

<pallas_src>
import functools

import numpy as np
import jax
import jax.numpy as jnp
from jax import lax
from jax.experimental import pallas as pl
from jax.experimental.pallas import tpu as pltpu


def _round_up(v, m):
    return (v + m - 1) // m * m


def _mod_k(t, k):
    # values are guaranteed in [0, 2k); cheap lane-wise "mod k" without int div.
    return jnp.where(t >= k, t - k, t)


def _spline_conv_kernel(col_ref, row_ref, pseudo_ref, x_ref, sel_ref, kidx_ref,
                        wflat_ref, rw_ref, out_ref, *, N_pad, Kdim, deg_lane):
    """One edge-tile step of a spline_conv layer (degree=1, 2-D pseudo, open)."""
    t = pl.program_id(0)
    n_tiles = pl.num_programs(0)
    TILE_E = col_ref.shape[0]

    @pl.when(t == 0)
    def _init():
        out_ref[...] = jnp.zeros_like(out_ref)

    x = x_ref[...]                          # (N_pad, Cin)      f32
    col = col_ref[...]                      # (TILE_E, 1)       int32 (source)
    row = row_ref[...]                      # (1, TILE_E)       int32 (target)
    pseudo = pseudo_ref[...]                # (TILE_E, 2)       f32

    # ---- gather x[col] via a per-tile one-hot matmul on the MXU ----
    g_iota = lax.broadcasted_iota(jnp.int32, (TILE_E, N_pad), 1)
    G = (g_iota == col).astype(jnp.float32)                       # (TILE_E, N_pad)
    xcol = jnp.dot(G, x, preferred_element_type=jnp.float32)      # (TILE_E, Cin)

    # ---- degree-1 open B-spline basis, built lane-dense over K*Cin ----
    mul = float(Kdim - 1)                   # kernel_size - degree * is_open_spline
    v0 = pseudo[:, 0:1] * mul
    v1 = pseudo[:, 1:2] * mul
    g0 = jnp.floor(v0)
    g1 = jnp.floor(v1)
    f0 = v0 - g0
    f1 = v1 - g1
    g0i = g0.astype(jnp.int32)
    g1i = g1.astype(jnp.int32)

    kidx = kidx_ref[...]                    # (1, KCin_pad) int32: j // Cin, -1 in pad lanes
    coef = jnp.zeros((TILE_E, kidx.shape[1]), jnp.float32)
    for k1 in range(2):
        for k0 in range(2):
            b = (f0 if k0 == 1 else (1.0 - f0)) * (f1 if k1 == 1 else (1.0 - f1))
            wi = _mod_k(g0i + k0, Kdim) + Kdim * _mod_k(g1i + k1, Kdim)  # (TILE_E,1)
            coef = coef + jnp.where(wi == kidx, b, 0.0)           # (TILE_E, KCin_pad)

    # ---- fused spline weighting: one (TILE_E, K*Cin) @ (K*Cin, Cout) matmul ----
    # xrep[e, k*Cin + c] = xcol[e, c]  (selection matrix S keeps it on the MXU)
    xrep = jnp.dot(xcol, sel_ref[...], preferred_element_type=jnp.float32)
    acc = jnp.dot(coef * xrep, wflat_ref[...],
                  preferred_element_type=jnp.float32)             # (TILE_E, Cout_pad)

    # reserved lane carries a 1 per edge so the scatter matmul also counts degree
    lane = lax.broadcasted_iota(jnp.int32, acc.shape, 1)
    acc = jnp.where(lane == deg_lane, 1.0, acc)

    # ---- scatter-add to target nodes via a per-tile one-hot matmul ----
    # padded edges have row == N_pad (sentinel) -> their one-hot column is all zero.
    s_iota = lax.broadcasted_iota(jnp.int32, (N_pad, TILE_E), 0)
    A = (s_iota == row).astype(jnp.float32)                       # (N_pad, TILE_E)
    total = out_ref[...] + jnp.dot(A, acc, preferred_element_type=jnp.float32)
    out_ref[...] = total

    @pl.when(t == n_tiles - 1)
    def _finalize():
        deg = jnp.maximum(total[:, deg_lane:deg_lane + 1], 1.0)   # (N_pad, 1)
        inv = pl.reciprocal(deg, approx=True)
        out_ref[...] = total * inv + jnp.dot(x, rw_ref[...],
                                             preferred_element_type=jnp.float32)


def spline_conv_pallas(x, edge_index, pseudo, weight, root_weight, kdim=5,
                       tile_e=128):
    """x: (N, Cin), edge_index: (2, E) int, pseudo: (E, 2),
       weight: (kdim*kdim, Cin, Cout), root_weight: (Cin, Cout)  ->  (N, Cout)."""
    N, Cin = x.shape
    E = edge_index.shape[1]
    K = kdim * kdim
    Cout = weight.shape[2]

    N_pad = _round_up(N, 8)
    E_pad = _round_up(max(E, 1), tile_e)
    KCin = K * Cin
    KCin_pad = _round_up(KCin, 128)
    Cout_pad = max(_round_up(Cout + 1, 128), 128)   # spare lane for the degree count
    deg_lane = Cout_pad - 1
    n_tiles = E_pad // tile_e

    # ---- padded / restructured operands (host side, done once per call) ----
    x_p = jnp.zeros((N_pad, Cin), jnp.float32).at[:N].set(x.astype(jnp.float32))

    col = jnp.zeros((E_pad, 1), jnp.int32).at[:E, 0].set(
        edge_index[1].astype(jnp.int32))
    row = jnp.full((1, E_pad), N_pad, jnp.int32).at[0, :E].set(   # N_pad = drop sentinel
        edge_index[0].astype(jnp.int32))
    ps = jnp.zeros((E_pad, 2), jnp.float32).at[:E].set(pseudo.astype(jnp.float32))

    j = np.arange(KCin_pad)
    kidx_np = np.where(j < KCin, j // Cin, -1).astype(np.int32).reshape(1, KCin_pad)
    sel_np = np.zeros((Cin, KCin_pad), np.float32)
    sel_np[np.arange(KCin) % Cin, np.arange(KCin)] = 1.0
    kidx = jnp.asarray(kidx_np)
    sel = jnp.asarray(sel_np)

    wflat = jnp.zeros((KCin_pad, Cout_pad), jnp.float32).at[:KCin, :Cout].set(
        weight.astype(jnp.float32).reshape(KCin, Cout))
    rw_p = jnp.zeros((Cin, Cout_pad), jnp.float32).at[:, :Cout].set(
        root_weight.astype(jnp.float32))

    kernel = functools.partial(_spline_conv_kernel,
                               N_pad=N_pad, Kdim=kdim, deg_lane=deg_lane)

    grid_spec = pltpu.PrefetchScalarGridSpec(
        num_scalar_prefetch=0,
        grid=(n_tiles,),
        in_specs=[
            pl.BlockSpec((tile_e, 1), lambda t: (t, 0)),          # col (per tile)
            pl.BlockSpec((1, tile_e), lambda t: (0, t)),          # row (per tile)
            pl.BlockSpec((tile_e, 2), lambda t: (t, 0)),          # pseudo (per tile)
            pl.BlockSpec((N_pad, Cin), lambda t: (0, 0)),         # x (resident)
            pl.BlockSpec((Cin, KCin_pad), lambda t: (0, 0)),      # selection matrix
            pl.BlockSpec((1, KCin_pad), lambda t: (0, 0)),        # lane->kernel index
            pl.BlockSpec((KCin_pad, Cout_pad), lambda t: (0, 0)), # fused weight
            pl.BlockSpec((Cin, Cout_pad), lambda t: (0, 0)),      # root weight
        ],
        out_specs=pl.BlockSpec((N_pad, Cout_pad), lambda t: (0, 0)),  # accumulator
    )

    out_pad = pl.pallas_call(
        kernel,
        out_shape=jax.ShapeDtypeStruct((N_pad, Cout_pad), jnp.float32),
        grid_spec=grid_spec,
        compiler_params=pltpu.CompilerParams(
            dimension_semantics=("arbitrary",),          # edge-accumulation axis
            vmem_limit_bytes=32 * 1024 * 1024,           # explicit budget (v7x-safe)
        ),
    )(col, row, ps, x_p, sel, kidx, wflat, rw_p)

    return out_pad[:N, :Cout]


# ---------------- pure-JAX reference (for correctness check) ----------------
def spline_conv_ref(x, edge_index, pseudo, weight, root_weight, kdim=5):
    row, col = edge_index[0], edge_index[1]
    N = x.shape[0]
    E = pseudo.shape[0]
    Cout = weight.shape[2]
    xcol = x[col]
    v = pseudo * float(kdim - 1)
    g = jnp.floor(v)
    f = v - g
    gi = g.astype(jnp.int32)
    out_e = jnp.zeros((E, Cout), jnp.float32)
    for k1 in range(2):
        for k0 in range(2):
            b = (f[:, 0] if k0 else 1.0 - f[:, 0]) * (f[:, 1] if k1 else 1.0 - f[:, 1])
            wi = (gi[:, 0] + k0) % kdim + kdim * ((gi[:, 1] + k1) % kdim)
            out_e = out_e + b[:, None] * jnp.einsum('ei,eio->eo', xcol, weight[wi])
    node = jnp.zeros((N, Cout), jnp.float32).at[row].add(out_e)
    deg = jnp.zeros((N,), jnp.float32).at[row].add(1.0)
    node = node / jnp.maximum(deg, 1.0)[:, None]
    return node + x @ root_weight


if __name__ == "__main__":
    # Small shapes consistent with the module (input=3, output=3, 5x5=25 kernels,
    # embed dim shrunk to 32 for a quick synthetic run; E > 128 exercises the
    # multi-tile edge grid / accumulator path).
    N, E = 64, 300
    Cin, Cemb, Cout, Kdim = 3, 32, 3, 5

    key = jax.random.PRNGKey(0)
    keys = jax.random.split(key, 8)
    x = jax.random.uniform(keys[0], (N, Cin), jnp.float32)
    edge_index = jax.random.randint(keys[1], (2, E), 0, N, jnp.int32)
    pseudo = jax.random.uniform(keys[2], (E, 2), jnp.float32)     # torch.rand in forward
    pseudo1 = jax.random.uniform(keys[3], (E, 2), jnp.float32)
    root_weight = jax.random.uniform(keys[4], (Cin, Cemb), jnp.float32)
    weight = jax.random.uniform(keys[5], (Kdim * Kdim, Cin, Cemb), jnp.float32)
    weight1 = jax.random.uniform(keys[6], (Kdim * Kdim, Cemb, Cout), jnp.float32)
    root_weight1 = jax.random.uniform(keys[7], (Cemb, Cout), jnp.float32)

    # forward(): encode then decode, both spline_conv layers as Pallas kernels
    encode = spline_conv_pallas(x, edge_index, pseudo, weight, root_weight, Kdim)
    decode = spline_conv_pallas(encode, edge_index, pseudo1, weight1, root_weight1, Kdim)
    decode = jax.block_until_ready(decode)

    enc_ref = spline_conv_ref(x, edge_index, pseudo, weight, root_weight, Kdim)
    dec_ref = spline_conv_ref(enc_ref, edge_index, pseudo1, weight1, root_weight1, Kdim)

    assert decode.shape == (N, Cout)
    assert jnp.allclose(decode, dec_ref, rtol=1e-2, atol=1e-2), "mismatch vs JAX reference"
    print("KERNEL_OK")
</pallas_src>

<mosaic_0001>
module attributes {stable_mosaic.version = 11 : i64} {
  func.func @_spline_conv_kernel(%arg0: i32, %arg1: memref<128x1xi32, #tpu.memory_space<vmem>>, %arg2: memref<1x128xi32, #tpu.memory_space<vmem>>, %arg3: memref<128x2xf32, #tpu.memory_space<vmem>>, %arg4: memref<64x3xf32, #tpu.memory_space<vmem>>, %arg5: memref<3x128xf32, #tpu.memory_space<vmem>>, %arg6: memref<1x128xi32, #tpu.memory_space<vmem>>, %arg7: memref<128x128xf32, #tpu.memory_space<vmem>>, %arg8: memref<3x128xf32, #tpu.memory_space<vmem>>, %arg9: memref<64x128xf32, #tpu.memory_space<vmem>>) attributes {dimension_semantics = [#tpu.dimension_semantics<arbitrary>], iteration_bounds = array<i64: 3>, scalar_prefetch = 0 : i64, scratch_operands = 0 : i64, tpu.core_type = #tpu.core_type<tc>, window_params = [{transform_indices = @transform_0, window_bounds = array<i64: 128, 1>}, {transform_indices = @transform_1, window_bounds = array<i64: 1, 128>}, {transform_indices = @transform_2, window_bounds = array<i64: 128, 2>}, {pipeline_mode = #tpu.pipeline_mode<synchronous>, transform_indices = @transform_3, window_bounds = array<i64: 64, 3>}, {pipeline_mode = #tpu.pipeline_mode<synchronous>, transform_indices = @transform_4, window_bounds = array<i64: 3, 128>}, {pipeline_mode = #tpu.pipeline_mode<synchronous>, transform_indices = @transform_5, window_bounds = array<i64: 1, 128>}, {pipeline_mode = #tpu.pipeline_mode<synchronous>, transform_indices = @transform_6, window_bounds = array<i64: 128, 128>}, {pipeline_mode = #tpu.pipeline_mode<synchronous>, transform_indices = @transform_7, window_bounds = array<i64: 3, 128>}, {pipeline_mode = #tpu.pipeline_mode<synchronous>, transform_indices = @transform_8, window_bounds = array<i64: 64, 128>}]} {
    %c0_i32 = arith.constant 0 : i32
    %0 = arith.cmpi eq, %arg0, %c0_i32 : i32
    %1 = arith.extui %0 : i1 to i32
    %c0_i32_0 = arith.constant 0 : i32
    %2 = arith.cmpi ne, %1, %c0_i32_0 : i32
    scf.if %2 {
      %cst_60 = arith.constant 0.000000e+00 : f32
      %161 = vector.broadcast %cst_60 : f32 to vector<64x128xf32>
      %c0_61 = arith.constant 0 : index
      %c0_62 = arith.constant 0 : index
      %162 = vector.load %arg9[%c0_61, %c0_62] : memref<64x128xf32, #tpu.memory_space<vmem>>, vector<64x128xf32>
      tpu.vector_store %arg9[%c0_61, %c0_62], %161 {strides = array<i32>} : memref<64x128xf32, #tpu.memory_space<vmem>>, vector<64x128xf32>,
    } else {
    }
    %c0 = arith.constant 0 : index
    %c0_1 = arith.constant 0 : index
    %3 = vector.load %arg4[%c0, %c0_1] : memref<64x3xf32, #tpu.memory_space<vmem>>, vector<64x3xf32>
    %c0_2 = arith.constant 0 : index
    %c0_3 = arith.constant 0 : index
    %4 = vector.load %arg1[%c0_2, %c0_3] : memref<128x1xi32, #tpu.memory_space<vmem>>, vector<128x1xi32>
    %c0_4 = arith.constant 0 : index
    %c0_5 = arith.constant 0 : index
    %5 = vector.load %arg2[%c0_4, %c0_5] : memref<1x128xi32, #tpu.memory_space<vmem>>, vector<1x128xi32>
    %c0_6 = arith.constant 0 : index
    %c0_7 = arith.constant 0 : index
    %6 = vector.load %arg3[%c0_6, %c0_7] : memref<128x2xf32, #tpu.memory_space<vmem>>, vector<128x2xf32>
    %7 = tpu.iota {dimensions = array<i32: 1>} : vector<128x64xi32>
    %8 = vector.broadcast %4 : vector<128x1xi32> to vector<128x64xi32>
    %9 = arith.cmpi eq, %7, %8 : vector<128x64xi32>
    %10 = arith.extui %9 : vector<128x64xi1> to vector<128x64xi32>
    %11 = arith.sitofp %10 : vector<128x64xi32> to vector<128x64xf32>
    %cst = arith.constant dense<0.000000e+00> : vector<128x3xf32>
    %12 = tpu.matmul %11, %3, %cst {dimension_numbers = #tpu.dot_dimension_numbers<[1], [0], [0], [1], [0, 0, 1, 1], [], []>} : vector<128x64xf32>, vector<64x3xf32>, vector<128x3xf32> -> vector<128x3xf32>
    %13 = vector.extract_strided_slice %6 {offsets = [0, 0], sizes = [128, 1], strides = [1, 1]} : vector<128x2xf32> to vector<128x1xf32>
    %cst_8 = arith.constant 4.000000e+00 : f32
    %14 = vector.broadcast %cst_8 : f32 to vector<128x1xf32>
    %15 = arith.mulf %13, %14 : vector<128x1xf32>
    %16 = vector.extract_strided_slice %6 {offsets = [0, 1], sizes = [128, 1], strides = [1, 1]} : vector<128x2xf32> to vector<128x1xf32>
    %cst_9 = arith.constant 4.000000e+00 : f32
    %17 = vector.broadcast %cst_9 : f32 to vector<128x1xf32>
    %18 = arith.mulf %16, %17 : vector<128x1xf32>
    %19 = math.floor %15 : vector<128x1xf32>
    %20 = math.floor %18 : vector<128x1xf32>
    %21 = arith.subf %15, %19 : vector<128x1xf32>
    %22 = arith.subf %18, %20 : vector<128x1xf32>
    %23 = arith.fptosi %19 : vector<128x1xf32> to vector<128x1xi32>
    %24 = arith.fptosi %20 : vector<128x1xf32> to vector<128x1xi32>
    %c0_10 = arith.constant 0 : index
    %c0_11 = arith.constant 0 : index
    %25 = vector.load %arg6[%c0_10, %c0_11] : memref<1x128xi32, #tpu.memory_space<vmem>>, vector<1x128xi32>
    %cst_12 = arith.constant 0.000000e+00 : f32
    %26 = vector.broadcast %cst_12 : f32 to vector<128x128xf32>
    %cst_13 = arith.constant 1.000000e+00 : f32
    %27 = vector.broadcast %cst_13 : f32 to vector<128x1xf32>
    %28 = arith.subf %27, %21 : vector<128x1xf32>
    %cst_14 = arith.constant 1.000000e+00 : f32
    %29 = vector.broadcast %cst_14 : f32 to vector<128x1xf32>
    %30 = arith.subf %29, %22 : vector<128x1xf32>
    %31 = arith.mulf %28, %30 : vector<128x1xf32>
    %c0_i32_15 = arith.constant 0 : i32
    %32 = vector.broadcast %c0_i32_15 : i32 to vector<128x1xi32>
    %33 = arith.addi %23, %32 : vector<128x1xi32>
    %c5_i32 = arith.constant 5 : i32
    %34 = vector.broadcast %c5_i32 : i32 to vector<128x1xi32>
    %35 = arith.cmpi sge, %33, %34 : vector<128x1xi32>
    %c5_i32_16 = arith.constant 5 : i32
    %36 = vector.broadcast %c5_i32_16 : i32 to vector<128x1xi32>
    %37 = arith.subi %33, %36 : vector<128x1xi32>
    %38 = arith.select %35, %37, %33 : vector<128x1xi1>, vector<128x1xi32>
    %c0_i32_17 = arith.constant 0 : i32
    %39 = vector.broadcast %c0_i32_17 : i32 to vector<128x1xi32>
    %40 = arith.addi %24, %39 : vector<128x1xi32>
    %c5_i32_18 = arith.constant 5 : i32
    %41 = vector.broadcast %c5_i32_18 : i32 to vector<128x1xi32>
    %42 = arith.cmpi sge, %40, %41 : vector<128x1xi32>
    %c5_i32_19 = arith.constant 5 : i32
    %43 = vector.broadcast %c5_i32_19 : i32 to vector<128x1xi32>
    %44 = arith.subi %40, %43 : vector<128x1xi32>
    %45 = arith.select %42, %44, %40 : vector<128x1xi1>, vector<128x1xi32>
    %c5_i32_20 = arith.constant 5 : i32
    %46 = vector.broadcast %c5_i32_20 : i32 to vector<128x1xi32>
    %47 = arith.muli %46, %45 : vector<128x1xi32>
    %48 = arith.addi %38, %47 : vector<128x1xi32>
    %49 = vector.broadcast %48 : vector<128x1xi32> to vector<128x128xi32>
    %50 = vector.broadcast %25 : vector<1x128xi32> to vector<128x128xi32>
    %51 = arith.cmpi eq, %49, %50 : vector<128x128xi32>
    %cst_21 = arith.constant 0.000000e+00 : f32
    %52 = vector.shape_cast %31 : vector<128x1xf32> to vector<128x1xf32>
    %53 = vector.broadcast %52 : vector<128x1xf32> to vector<128x128xf32>
    %54 = vector.broadcast %cst_21 : f32 to vector<128x128xf32>
    %55 = arith.select %51, %53, %54 : vector<128x128xi1>, vector<128x128xf32>
    %56 = arith.addf %26, %55 : vector<128x128xf32>
    %cst_22 = arith.constant 1.000000e+00 : f32
    %57 = vector.broadcast %cst_22 : f32 to vector<128x1xf32>
    %58 = arith.subf %57, %22 : vector<128x1xf32>
    %59 = arith.mulf %21, %58 : vector<128x1xf32>
    %c1_i32 = arith.constant 1 : i32
    %60 = vector.broadcast %c1_i32 : i32 to vector<128x1xi32>
    %61 = arith.addi %23, %60 : vector<128x1xi32>
    %c5_i32_23 = arith.constant 5 : i32
    %62 = vector.broadcast %c5_i32_23 : i32 to vector<128x1xi32>
    %63 = arith.cmpi sge, %61, %62 : vector<128x1xi32>
    %c5_i32_24 = arith.constant 5 : i32
    %64 = vector.broadcast %c5_i32_24 : i32 to vector<128x1xi32>
    %65 = arith.subi %61, %64 : vector<128x1xi32>
    %66 = arith.select %63, %65, %61 : vector<128x1xi1>, vector<128x1xi32>
    %c0_i32_25 = arith.constant 0 : i32
    %67 = vector.broadcast %c0_i32_25 : i32 to vector<128x1xi32>
    %68 = arith.addi %24, %67 : vector<128x1xi32>
    %c5_i32_26 = arith.constant 5 : i32
    %69 = vector.broadcast %c5_i32_26 : i32 to vector<128x1xi32>
    %70 = arith.cmpi sge, %68, %69 : vector<128x1xi32>
    %c5_i32_27 = arith.constant 5 : i32
    %71 = vector.broadcast %c5_i32_27 : i32 to vector<128x1xi32>
    %72 = arith.subi %68, %71 : vector<128x1xi32>
    %73 = arith.select %70, %72, %68 : vector<128x1xi1>, vector<128x1xi32>
    %c5_i32_28 = arith.constant 5 : i32
    %74 = vector.broadcast %c5_i32_28 : i32 to vector<128x1xi32>
    %75 = arith.muli %74, %73 : vector<128x1xi32>
    %76 = arith.addi %66, %75 : vector<128x1xi32>
    %77 = vector.broadcast %76 : vector<128x1xi32> to vector<128x128xi32>
    %78 = vector.broadcast %25 : vector<1x128xi32> to vector<128x128xi32>
    %79 = arith.cmpi eq, %77, %78 : vector<128x128xi32>
    %cst_29 = arith.constant 0.000000e+00 : f32
    %80 = vector.shape_cast %59 : vector<128x1xf32> to vector<128x1xf32>
    %81 = vector.broadcast %80 : vector<128x1xf32> to vector<128x128xf32>
    %82 = vector.broadcast %cst_29 : f32 to vector<128x128xf32>
    %83 = arith.select %79, %81, %82 : vector<128x128xi1>, vector<128x128xf32>
    %84 = arith.addf %56, %83 : vector<128x128xf32>
    %cst_30 = arith.constant 1.000000e+00 : f32
    %85 = vector.broadcast %cst_30 : f32 to vector<128x1xf32>
    %86 = arith.subf %85, %21 : vector<128x1xf32>
    %87 = arith.mulf %86, %22 : vector<128x1xf32>
    %c0_i32_31 = arith.constant 0 : i32
    %88 = vector.broadcast %c0_i32_31 : i32 to vector<128x1xi32>
    %89 = arith.addi %23, %88 : vector<128x1xi32>
    %c5_i32_32 = arith.constant 5 : i32
    %90 = vector.broadcast %c5_i32_32 : i32 to vector<128x1xi32>
    %91 = arith.cmpi sge, %89, %90 : vector<128x1xi32>
    %c5_i32_33 = arith.constant 5 : i32
    %92 = vector.broadcast %c5_i32_33 : i32 to vector<128x1xi32>
    %93 = arith.subi %89, %92 : vector<128x1xi32>
    %94 = arith.select %91, %93, %89 : vector<128x1xi1>, vector<128x1xi32>
    %c1_i32_34 = arith.constant 1 : i32
    %95 = vector.broadcast %c1_i32_34 : i32 to vector<128x1xi32>
    %96 = arith.addi %24, %95 : vector<128x1xi32>
    %c5_i32_35 = arith.constant 5 : i32
    %97 = vector.broadcast %c5_i32_35 : i32 to vector<128x1xi32>
    %98 = arith.cmpi sge, %96, %97 : vector<128x1xi32>
    %c5_i32_36 = arith.constant 5 : i32
    %99 = vector.broadcast %c5_i32_36 : i32 to vector<128x1xi32>
    %100 = arith.subi %96, %99 : vector<128x1xi32>
    %101 = arith.select %98, %100, %96 : vector<128x1xi1>, vector<128x1xi32>
    %c5_i32_37 = arith.constant 5 : i32
    %102 = vector.broadcast %c5_i32_37 : i32 to vector<128x1xi32>
    %103 = arith.muli %102, %101 : vector<128x1xi32>
    %104 = arith.addi %94, %103 : vector<128x1xi32>
    %105 = vector.broadcast %104 : vector<128x1xi32> to vector<128x128xi32>
    %106 = vector.broadcast %25 : vector<1x128xi32> to vector<128x128xi32>
    %107 = arith.cmpi eq, %105, %106 : vector<128x128xi32>
    %cst_38 = arith.constant 0.000000e+00 : f32
    %108 = vector.shape_cast %87 : vector<128x1xf32> to vector<128x1xf32>
    %109 = vector.broadcast %108 : vector<128x1xf32> to vector<128x128xf32>
    %110 = vector.broadcast %cst_38 : f32 to vector<128x128xf32>
    %111 = arith.select %107, %109, %110 : vector<128x128xi1>, vector<128x128xf32>
    %112 = arith.addf %84, %111 : vector<128x128xf32>
    %113 = arith.mulf %21, %22 : vector<128x1xf32>
    %c1_i32_39 = arith.constant 1 : i32
    %114 = vector.broadcast %c1_i32_39 : i32 to vector<128x1xi32>
    %115 = arith.addi %23, %114 : vector<128x1xi32>
    %c5_i32_40 = arith.constant 5 : i32
    %116 = vector.broadcast %c5_i32_40 : i32 to vector<128x1xi32>
    %117 = arith.cmpi sge, %115, %116 : vector<128x1xi32>
    %c5_i32_41 = arith.constant 5 : i32
    %118 = vector.broadcast %c5_i32_41 : i32 to vector<128x1xi32>
    %119 = arith.subi %115, %118 : vector<128x1xi32>
    %120 = arith.select %117, %119, %115 : vector<128x1xi1>, vector<128x1xi32>
    %c1_i32_42 = arith.constant 1 : i32
    %121 = vector.broadcast %c1_i32_42 : i32 to vector<128x1xi32>
    %122 = arith.addi %24, %121 : vector<128x1xi32>
    %c5_i32_43 = arith.constant 5 : i32
    %123 = vector.broadcast %c5_i32_43 : i32 to vector<128x1xi32>
    %124 = arith.cmpi sge, %122, %123 : vector<128x1xi32>
    %c5_i32_44 = arith.constant 5 : i32
    %125 = vector.broadcast %c5_i32_44 : i32 to vector<128x1xi32>
    %126 = arith.subi %122, %125 : vector<128x1xi32>
    %127 = arith.select %124, %126, %122 : vector<128x1xi1>, vector<128x1xi32>
    %c5_i32_45 = arith.constant 5 : i32
    %128 = vector.broadcast %c5_i32_45 : i32 to vector<128x1xi32>
    %129 = arith.muli %128, %127 : vector<128x1xi32>
    %130 = arith.addi %120, %129 : vector<128x1xi32>
    %131 = vector.broadcast %130 : vector<128x1xi32> to vector<128x128xi32>
    %132 = vector.broadcast %25 : vector<1x128xi32> to vector<128x128xi32>
    %133 = arith.cmpi eq, %131, %132 : vector<128x128xi32>
    %cst_46 = arith.constant 0.000000e+00 : f32
    %134 = vector.shape_cast %113 : vector<128x1xf32> to vector<128x1xf32>
    %135 = vector.broadcast %134 : vector<128x1xf32> to vector<128x128xf32>
    %136 = vector.broadcast %cst_46 : f32 to vector<128x128xf32>
    %137 = arith.select %133, %135, %136 : vector<128x128xi1>, vector<128x128xf32>
    %138 = arith.addf %112, %137 : vector<128x128xf32>
    %c0_47 = arith.constant 0 : index
    %c0_48 = arith.constant 0 : index
    %139 = vector.load %arg5[%c0_47, %c0_48] : memref<3x128xf32, #tpu.memory_space<vmem>>, vector<3x128xf32>
    %cst_49 = arith.constant dense<0.000000e+00> : vector<128x128xf32>
    %140 = tpu.matmul %12, %139, %cst_49 {dimension_numbers = #tpu.dot_dimension_numbers<[1], [0], [0], [1], [0, 0, 1, 1], [], []>} : vector<128x3xf32>, vector<3x128xf32>, vector<128x128xf32> -> vector<128x128xf32>
    %141 = arith.mulf %138, %140 : vector<128x128xf32>
    %c0_50 = arith.constant 0 : index
    %c0_51 = arith.constant 0 : index
    %142 = vector.load %arg7[%c0_50, %c0_51] : memref<128x128xf32, #tpu.memory_space<vmem>>, vector<128x128xf32>
    %cst_52 = arith.constant dense<0.000000e+00> : vector<128x128xf32>
    %143 = tpu.matmul %141, %142, %cst_52 {dimension_numbers = #tpu.dot_dimension_numbers<[1], [0], [0], [1], [0, 0, 1, 1], [], []>} : vector<128x128xf32>, vector<128x128xf32>, vector<128x128xf32> -> vector<128x128xf32>
    %144 = tpu.iota {dimensions = array<i32: 1>} : vector<128x128xi32>
    %c127_i32 = arith.constant 127 : i32
    %145 = vector.broadcast %c127_i32 : i32 to vector<128x128xi32>
    %146 = arith.cmpi eq, %144, %145 : vector<128x128xi32>
    %cst_53 = arith.constant 1.000000e+00 : f32
    %147 = vector.broadcast %cst_53 : f32 to vector<128x128xf32>
    %148 = arith.select %146, %147, %143 : vector<128x128xi1>, vector<128x128xf32>
    %149 = tpu.iota {dimensions = array<i32: 0>} : vector<64x128xi32>
    %150 = vector.broadcast %5 : vector<1x128xi32> to vector<64x128xi32>
    %151 = arith.cmpi eq, %149, %150 : vector<64x128xi32>
    %152 = arith.extui %151 : vector<64x128xi1> to vector<64x128xi32>
    %153 = arith.sitofp %152 : vector<64x128xi32> to vector<64x128xf32>
    %c0_54 = arith.constant 0 : index
    %c0_55 = arith.constant 0 : index
    %154 = vector.load %arg9[%c0_54, %c0_55] : memref<64x128xf32, #tpu.memory_space<vmem>>, vector<64x128xf32>
    %cst_56 = arith.constant dense<0.000000e+00> : vector<64x128xf32>
    %155 = tpu.matmul %153, %148, %cst_56 {dimension_numbers = #tpu.dot_dimension_numbers<[1], [0], [0], [1], [0, 0, 1, 1], [], []>} : vector<64x128xf32>, vector<128x128xf32>, vector<64x128xf32> -> vector<64x128xf32>
    %156 = arith.addf %154, %155 : vector<64x128xf32>
    %c0_57 = arith.constant 0 : index
    %c0_58 = arith.constant 0 : index
    %157 = vector.load %arg9[%c0_57, %c0_58] : memref<64x128xf32, #tpu.memory_space<vmem>>, vector<64x128xf32>
    tpu.vector_store %arg9[%c0_57, %c0_58], %156 {strides = array<i32>} : memref<64x128xf32, #tpu.memory_space<vmem>>, vector<64x128xf32>,
    %c2_i32 = arith.constant 2 : i32
    %158 = arith.cmpi eq, %arg0, %c2_i32 : i32
    %159 = arith.extui %158 : i1 to i32
    %c0_i32_59 = arith.constant 0 : i32
    %160 = arith.cmpi ne, %159, %c0_i32_59 : i32
    scf.if %160 {
      %161 = vector.extract_strided_slice %156 {offsets = [0, 127], sizes = [64, 1], strides = [1, 1]} : vector<64x128xf32> to vector<64x1xf32>
      %cst_60 = arith.constant 1.000000e+00 : f32
      %162 = vector.broadcast %cst_60 : f32 to vector<64x1xf32>
      %163 = arith.maximumf %161, %162 : vector<64x1xf32>
      %164 = tpu.reciprocal %163 {approx = true} : vector<64x1xf32> -> vector<64x1xf32>
      %165 = vector.broadcast %164 : vector<64x1xf32> to vector<64x128xf32>
      %166 = arith.mulf %156, %165 : vector<64x128xf32>
      %c0_61 = arith.constant 0 : index
      %c0_62 = arith.constant 0 : index
      %167 = vector.load %arg8[%c0_61, %c0_62] : memref<3x128xf32, #tpu.memory_space<vmem>>, vector<3x128xf32>
      %cst_63 = arith.constant dense<0.000000e+00> : vector<64x128xf32>
      %168 = tpu.matmul %3, %167, %cst_63 {dimension_numbers = #tpu.dot_dimension_numbers<[1], [0], [0], [1], [0, 0, 1, 1], [], []>} : vector<64x3xf32>, vector<3x128xf32>, vector<64x128xf32> -> vector<64x128xf32>
      %169 = arith.addf %166, %168 : vector<64x128xf32>
      %c0_64 = arith.constant 0 : index
      %c0_65 = arith.constant 0 : index
      %170 = vector.load %arg9[%c0_64, %c0_65] : memref<64x128xf32, #tpu.memory_space<vmem>>, vector<64x128xf32>
      tpu.vector_store %arg9[%c0_64, %c0_65], %169 {strides = array<i32>} : memref<64x128xf32, #tpu.memory_space<vmem>>, vector<64x128xf32>,
    } else {
    }
    return
  }
  func.func @transform_0(%arg0: i32) -> (i32, i32) {
    %c0_i32 = arith.constant 0 : i32
    %c0_i32_0 = arith.constant 0 : i32
    return %arg0, %c0_i32 : i32, i32
  }
  func.func @transform_1(%arg0: i32) -> (i32, i32) {
    %c0_i32 = arith.constant 0 : i32
    %c0_i32_0 = arith.constant 0 : i32
    return %c0_i32, %arg0 : i32, i32
  }
  func.func @transform_2(%arg0: i32) -> (i32, i32) {
    %c0_i32 = arith.constant 0 : i32
    %c0_i32_0 = arith.constant 0 : i32
    return %arg0, %c0_i32 : i32, i32
  }
  func.func @transform_3(%arg0: i32) -> (i32, i32) {
    %c0_i32 = arith.constant 0 : i32
    %c0_i32_0 = arith.constant 0 : i32
    %c0_i32_1 = arith.constant 0 : i32
    return %c0_i32, %c0_i32_0 : i32, i32
  }
  func.func @transform_4(%arg0: i32) -> (i32, i32) {
    %c0_i32 = arith.constant 0 : i32
    %c0_i32_0 = arith.constant 0 : i32
    %c0_i32_1 = arith.constant 0 : i32
    return %c0_i32, %c0_i32_0 : i32, i32
  }
  func.func @transform_5(%arg0: i32) -> (i32, i32) {
    %c0_i32 = arith.constant 0 : i32
    %c0_i32_0 = arith.constant 0 : i32
    %c0_i32_1 = arith.constant 0 : i32
    return %c0_i32, %c0_i32_0 : i32, i32
  }
  func.func @transform_6(%arg0: i32) -> (i32, i32) {
    %c0_i32 = arith.constant 0 : i32
    %c0_i32_0 = arith.constant 0 : i32
    %c0_i32_1 = arith.constant 0 : i32
    return %c0_i32, %c0_i32_0 : i32, i32
  }
  func.func @transform_7(%arg0: i32) -> (i32, i32) {
    %c0_i32 = arith.constant 0 : i32
    %c0_i32_0 = arith.constant 0 : i32
    %c0_i32_1 = arith.constant 0 : i32
    return %c0_i32, %c0_i32_0 : i32, i32
  }
  func.func @transform_8(%arg0: i32) -> (i32, i32) {
    %c0_i32 = arith.constant 0 : i32
    %c0_i32_0 = arith.constant 0 : i32
    %c0_i32_1 = arith.constant 0 : i32
    return %c0_i32, %c0_i32_0 : i32, i32
  }
}

</mosaic_0001>

<llo_original>
// kernel: tpu_custom_call.1
$region0: #{tpu_custom_call.1}
  #allocation0 [shape = 'u32[]', space=smem, size = 0x4, offset = 0x4, fixed_abs, tag = 'smem constant byte address 0x4 - core index']
  #allocation1 [shape = 'u32[144,128]{1,0:T(1,128)}', space=vmem, size = 0x12000, scoped, tag = 'internal scratch']
  %s0 = inlined_call_operand.vmem [shape: s32[384,1], index: 0, kind: input, shape index: {}]
  %s1 = inlined_call_operand.vmem [shape: s32[1,384], index: 1, kind: input, shape index: {}]
  %s2 = inlined_call_operand.vmem [shape: f32[384,2], index: 2, kind: input, shape index: {}]
  %s3 = inlined_call_operand.vmem [shape: f32[64,3], index: 3, kind: input, shape index: {}]
  %s4 = inlined_call_operand.vmem [shape: f32[3,128], index: 4, kind: input, shape index: {}]
  %s5 = inlined_call_operand.vmem [shape: s32[1,128], index: 5, kind: input, shape index: {}]
  %s6 = inlined_call_operand.vmem [shape: f32[128,128], index: 6, kind: input, shape index: {}]
  %s7 = inlined_call_operand.vmem [shape: f32[3,128], index: 7, kind: input, shape index: {}]
  %s8 = inlined_call_operand.hbm [shape: f32[64,128], index: 8, kind: output, shape index: {}]
  %s9 = sld [smem:[#allocation0]]
  $region73: #{tpu_custom_call.1} parent=0
    _
  %s11 = ssub.s32 1, %s9
  %s12 = scalar_select 0, %s11, %s9
  $region1: #{tpu_custom_call.1} parent=0
    #allocation2 [shape = 'u8[32768]{0}', space=vmem, size = 0x8000, scoped, tag = 'output window, operand 0, single buffered']
    #allocation3 [shape = 's32[2]{0}', space=sflag, size = 0x8, scoped, tag = 'scoped memory for tpu_custom_call.1']
    %13 = vsyncpa [#allocation3], 0
    loop: start=0, step=1, limit=5
    $region2: #{tpu_custom_call.1} parent=1 // loop_pre_header
      _
    $region3: #{tpu_custom_call.1} parent=1 // loop_header
      %s15 = sphi 0, %s19
      %p16 = scmp.ge.s32.totalorder %s15, 5
      %s25 = sphi 0, %s27
      %s28 = sphi 0, %s25
      %s29 = sphi 0, %s28
      %s45 = sphi 0, %s29
      %s51 = sphi 0, %s53
      %s54 = sphi 0, %s51
      %s55 = sphi 0, %s54
      %s71 = sphi 0, %s55
      %s77 = sphi 0, %s79
      %s80 = sphi 0, %s77
      %s81 = sphi 0, %s80
      %s97 = sphi 0, %s81
      %s101 = sphi 0, %s101
      %s103 = sphi 0, %s101
      %s104 = sphi 0, %s103
      %s118 = sphi 0, %s104
      %s122 = sphi 0, %s122
      %s124 = sphi 0, %s122
      %s125 = sphi 0, %s124
      %s139 = sphi 0, %s125
      %s143 = sphi 0, %s143
      %s145 = sphi 0, %s143
      %s146 = sphi 0, %s145
      %s160 = sphi 0, %s146
      %s164 = sphi 0, %s164
      %s166 = sphi 0, %s164
      %s167 = sphi 0, %s166
      %s181 = sphi 0, %s167
      %s185 = sphi 0, %s185
      %s187 = sphi 0, %s185
      %s188 = sphi 0, %s187
      %s202 = sphi 0, %s188
      %s206 = sphi 0, %s206
      %s208 = sphi 0, %s206
      %s209 = sphi 0, %s208
      %s223 = sphi 0, %s209
    $region4: #{tpu_custom_call.1} parent=1 // loop_header_branch
      %18 = sbr.rel (%p16) target = $region8
    $region5: #{tpu_custom_call.1} parent=1 // loop_body
      %s20 = ssub.s32 %s15, 1
      %s21 = ssub.s32 %s15, 2
      %s22 = sadd.s32 %s15, 1
      %s23 = ssub.s32 %s15, %s22
      %p24 = scmp.eq.s32.totalorder %s23, 0
      %s26 = sadd.s32 %s25, 1
      %s27 = scalar_select %p24, %s25, %s26
      %p30 = pneg %p24
      %p31 = scmp.eq.s32.totalorder %s15, 2
      %p32 = por %p30, %p31
      %p33 = scmp.ne.s32.totalorder %s25, %s28
      %p34 = scmp.eq.s32.totalorder %s15, 0
      %p35 = por %p33, %p34
      %p36 = scmp.ne.s32.totalorder %s25, %s28
      %p37 = scmp.eq.s32.totalorder %s20, 2
      %p38 = por %p36, %p37
      %p39 = scmp.ne.s32.totalorder %s28, %s29
      %p40 = scmp.eq.s32.totalorder %s20, 0
      %p41 = por %p39, %p40
      %p42 = scmp.ne.s32.totalorder %s28, %s29
      %p43 = scmp.eq.s32.totalorder %s21, 2
      %p44 = por %p42, %p43
      %p46 = scmp.ne.s32.totalorder %s29, %s45
      %p47 = scmp.eq.s32.totalorder %s21, 0
      %p48 = por %p46, %p47
      %s49 = ssub.s32 %s15, %s22
      %p50 = scmp.eq.s32.totalorder %s49, 0
      %s52 = sadd.s32 %s51, 1
      %s53 = scalar_select %p50, %s51, %s52
      %p56 = pneg %p50
      %p57 = scmp.eq.s32.totalorder %s15, 2
      %p58 = por %p56, %p57
      %p59 = scmp.ne.s32.totalorder %s51, %s54
      %p60 = scmp.eq.s32.totalorder %s15, 0
      %p61 = por %p59, %p60
      %p62 = scmp.ne.s32.totalorder %s51, %s54
      %p63 = scmp.eq.s32.totalorder %s20, 2
      %p64 = por %p62, %p63
      %p65 = scmp.ne.s32.totalorder %s54, %s55
      %p66 = scmp.eq.s32.totalorder %s20, 0
      %p67 = por %p65, %p66
      %p68 = scmp.ne.s32.totalorder %s54, %s55
      %p69 = scmp.eq.s32.totalorder %s21, 2
      %p70 = por %p68, %p69
      %p72 = scmp.ne.s32.totalorder %s55, %s71
      %p73 = scmp.eq.s32.totalorder %s21, 0
      %p74 = por %p72, %p73
      %s75 = ssub.s32 %s15, %s22
      %p76 = scmp.eq.s32.totalorder %s75, 0
      %s78 = sadd.s32 %s77, 1
      %s79 = scalar_select %p76, %s77, %s78
      %p82 = pneg %p76
      %p83 = scmp.eq.s32.totalorder %s15, 2
      %p84 = por %p82, %p83
      %p85 = scmp.ne.s32.totalorder %s77, %s80
      %p86 = scmp.eq.s32.totalorder %s15, 0
      %p87 = por %p85, %p86
      %p88 = scmp.ne.s32.totalorder %s77, %s80
      %p89 = scmp.eq.s32.totalorder %s20, 2
      %p90 = por %p88, %p89
      %p91 = scmp.ne.s32.totalorder %s80, %s81
      %p92 = scmp.eq.s32.totalorder %s20, 0
      %p93 = por %p91, %p92
      %p94 = scmp.ne.s32.totalorder %s80, %s81
      %p95 = scmp.eq.s32.totalorder %s21, 2
      %p96 = por %p94, %p95
      %p98 = scmp.ne.s32.totalorder %s81, %s97
      %p99 = scmp.eq.s32.totalorder %s21, 0
      %p100 = por %p98, %p99
      %s102 = sadd.s32 %s101, 1
      %p105 = scmp.eq.s32.totalorder %s15, 2
      %p106 = scmp.ne.s32.totalorder %s101, %s103
      %p107 = scmp.eq.s32.totalorder %s15, 0
      %p108 = por %p106, %p107
      %p109 = scmp.ne.s32.totalorder %s101, %s103
      %p110 = scmp.eq.s32.totalorder %s20, 2
      %p111 = por %p109, %p110
      %p112 = scmp.ne.s32.totalorder %s103, %s104
      %p113 = scmp.eq.s32.totalorder %s20, 0
      %p114 = por %p112, %p113
      %p115 = scmp.ne.s32.totalorder %s103, %s104
      %p116 = scmp.eq.s32.totalorder %s21, 2
      %p117 = por %p115, %p116
      %p119 = scmp.ne.s32.totalorder %s104, %s118
      %p120 = scmp.eq.s32.totalorder %s21, 0
      %p121 = por %p119, %p120
      %s123 = sadd.s32 %s122, 1
      %p126 = scmp.eq.s32.totalorder %s15, 2
      %p127 = scmp.ne.s32.totalorder %s122, %s124
      %p128 = scmp.eq.s32.totalorder %s15, 0
      %p129 = por %p127, %p128
      %p130 = scmp.ne.s32.totalorder %s122, %s124
      %p131 = scmp.eq.s32.totalorder %s20, 2
      %p132 = por %p130, %p131
      %p133 = scmp.ne.s32.totalorder %s124, %s125
      %p134 = scmp.eq.s32.totalorder %s20, 0
      %p135 = por %p133, %p134
      %p136 = scmp.ne.s32.totalorder %s124, %s125
      %p137 = scmp.eq.s32.totalorder %s21, 2
      %p138 = por %p136, %p137
      %p140 = scmp.ne.s32.totalorder %s125, %s139
      %p141 = scmp.eq.s32.totalorder %s21, 0
      %p142 = por %p140, %p141
      %s144 = sadd.s32 %s143, 1
      %p147 = scmp.eq.s32.totalorder %s15, 2
      %p148 = scmp.ne.s32.totalorder %s143, %s145
      %p149 = scmp.eq.s32.totalorder %s15, 0
      %p150 = por %p148, %p149
      %p151 = scmp.ne.s32.totalorder %s143, %s145
      %p152 = scmp.eq.s32.totalorder %s20, 2
      %p153 = por %p151, %p152
      %p154 = scmp.ne.s32.totalorder %s145, %s146
      %p155 = scmp.eq.s32.totalorder %s20, 0
      %p156 = por %p154, %p155
      %p157 = scmp.ne.s32.totalorder %s145, %s146
      %p158 = scmp.eq.s32.totalorder %s21, 2
      %p159 = por %p157, %p158
      %p161 = scmp.ne.s32.totalorder %s146, %s160
      %p162 = scmp.eq.s32.totalorder %s21, 0
      %p163 = por %p161, %p162
      %s165 = sadd.s32 %s164, 1
      %p168 = scmp.eq.s32.totalorder %s15, 2
      %p169 = scmp.ne.s32.totalorder %s164, %s166
      %p170 = scmp.eq.s32.totalorder %s15, 0
      %p171 = por %p169, %p170
      %p172 = scmp.ne.s32.totalorder %s164, %s166
      %p173 = scmp.eq.s32.totalorder %s20, 2
      %p174 = por %p172, %p173
      %p175 = scmp.ne.s32.totalorder %s166, %s167
      %p176 = scmp.eq.s32.totalorder %s20, 0
      %p177 = por %p175, %p176
      %p178 = scmp.ne.s32.totalorder %s166, %s167
      %p179 = scmp.eq.s32.totalorder %s21, 2
      %p180 = por %p178, %p179
      %p182 = scmp.ne.s32.totalorder %s167, %s181
      %p183 = scmp.eq.s32.totalorder %s21, 0
      %p184 = por %p182, %p183
      %s186 = sadd.s32 %s185, 1
      %p189 = scmp.eq.s32.totalorder %s15, 2
      %p190 = scmp.ne.s32.totalorder %s185, %s187
      %p191 = scmp.eq.s32.totalorder %s15, 0
      %p192 = por %p190, %p191
      %p193 = scmp.ne.s32.totalorder %s185, %s187
      %p194 = scmp.eq.s32.totalorder %s20, 2
      %p195 = por %p193, %p194
      %p196 = scmp.ne.s32.totalorder %s187, %s188
      %p197 = scmp.eq.s32.totalorder %s20, 0
      %p198 = por %p196, %p197
      %p199 = scmp.ne.s32.totalorder %s187, %s188
      %p200 = scmp.eq.s32.totalorder %s21, 2
      %p201 = por %p199, %p200
      %p203 = scmp.ne.s32.totalorder %s188, %s202
      %p204 = scmp.eq.s32.totalorder %s21, 0
      %p205 = por %p203, %p204
      %s207 = sadd.s32 %s206, 1
      %p210 = scmp.eq.s32.totalorder %s15, 2
      %p211 = scmp.ne.s32.totalorder %s206, %s208
      %p212 = scmp.eq.s32.totalorder %s15, 0
      %p213 = por %p211, %p212
      %p214 = scmp.ne.s32.totalorder %s206, %s208
      %p215 = scmp.eq.s32.totalorder %s20, 2
      %p216 = por %p214, %p215
      %p217 = scmp.ne.s32.totalorder %s208, %s209
      %p218 = scmp.eq.s32.totalorder %s20, 0
      %p219 = por %p217, %p218
      %p220 = scmp.ne.s32.totalorder %s208, %s209
      %p221 = scmp.eq.s32.totalorder %s21, 2
      %p222 = por %p220, %p221
      %p224 = scmp.ne.s32.totalorder %s209, %s223
      %p225 = scmp.eq.s32.totalorder %s21, 0
      %p226 = por %p224, %p225
      %p227 = scmp.le.s32.totalorder 1, %s15
      %p228 = scmp.lt.s32.totalorder %s15, 4
      %p229 = pnand %p227, %p228
      %p230 = pneg %p229
      // Predicated region
      $region9: #{tpu_custom_call.1} parent=5 // pred_check
        _
      $region10: #{tpu_custom_call.1} parent=5 // pred_check_branch
        %232 = sbr.rel (%p229) target = $region12
      $region11: #{tpu_custom_call.1} parent=5 // pred_region
        %s233 = ssub.s32 %s15, 1
        // Predicated region
        $region13: #{tpu_custom_call.1} parent=11 // pred_check
          %p234 = pneg %p114
        $region14: #{tpu_custom_call.1} parent=11 // pred_check_branch
          %236 = sbr.rel (%p234) target = $region16
        $region15: #{tpu_custom_call.1} parent=11 // pred_region
          _
        $region16: #{tpu_custom_call.1} parent=11 // pred_fallthru
          _
        // Predicated region
        $region17: #{tpu_custom_call.1} parent=11 // pred_check
          %p237 = pneg %p135
        $region18: #{tpu_custom_call.1} parent=11 // pred_check_branch
          %239 = sbr.rel (%p237) target = $region20
        $region19: #{tpu_custom_call.1} parent=11 // pred_region
          _
        $region20: #{tpu_custom_call.1} parent=11 // pred_fallthru
          _
        // Predicated region
        $region21: #{tpu_custom_call.1} parent=11 // pred_check
          %p240 = pneg %p156
        $region22: #{tpu_custom_call.1} parent=11 // pred_check_branch
          %242 = sbr.rel (%p240) target = $region24
        $region23: #{tpu_custom_call.1} parent=11 // pred_region
          _
        $region24: #{tpu_custom_call.1} parent=11 // pred_fallthru
          _
        // Predicated region
        $region25: #{tpu_custom_call.1} parent=11 // pred_check
          %p243 = pneg %p177
        $region26: #{tpu_custom_call.1} parent=11 // pred_check_branch
          %245 = sbr.rel (%p243) target = $region28
        $region27: #{tpu_custom_call.1} parent=11 // pred_region
          _
        $region28: #{tpu_custom_call.1} parent=11 // pred_fallthru
          _
        // Predicated region
        $region29: #{tpu_custom_call.1} parent=11 // pred_check
          %p246 = pneg %p198
        $region30: #{tpu_custom_call.1} parent=11 // pred_check_branch
          %248 = sbr.rel (%p246) target = $region32
        $region31: #{tpu_custom_call.1} parent=11 // pred_region
          _
        $region32: #{tpu_custom_call.1} parent=11 // pred_fallthru
          _
      $region12: #{tpu_custom_call.1} parent=5 // pred_fallthru
        _
      %p249 = scmp.lt.s32.totalorder %s15, 3
      // Predicated region
      $region33: #{tpu_custom_call.1} parent=5 // pred_check
        %p250 = pneg %p249
      $region34: #{tpu_custom_call.1} parent=5 // pred_check_branch
        %252 = sbr.rel (%p250) target = $region36
      $region35: #{tpu_custom_call.1} parent=5 // pred_region
        // Predicated region
        $region37: #{tpu_custom_call.1} parent=35 // pred_check
          %p253 = pneg %p35
        $region38: #{tpu_custom_call.1} parent=35 // pred_check_branch
          %255 = sbr.rel (%p253) target = $region40
        $region39: #{tpu_custom_call.1} parent=35 // pred_region
          %s256 = smul.u32 16, %s15
          %p257 = scmp.lt.s32.totalorder %s256, 47
          %s258 = scalar_select %p257, %s256, 47
          %s259 = smul.addr %s258, 8
          %s260 = scalar_lea.vmem %s0, %s259
          %s261 = smul.u32 16, %s15
        $region40: #{tpu_custom_call.1} parent=35 // pred_fallthru
          _
        // Predicated region
        $region41: #{tpu_custom_call.1} parent=35 // pred_check
          %p262 = pneg %p61
        $region42: #{tpu_custom_call.1} parent=35 // pred_check_branch
          %264 = sbr.rel (%p262) target = $region44
        $region43: #{tpu_custom_call.1} parent=35 // pred_region
          %p265 = scmp.lt.s32.totalorder %s15, 2
          %s266 = scalar_select %p265, %s15, 2
          %s267 = scalar_lea.vmem %s1, %s266
        $region44: #{tpu_custom_call.1} parent=35 // pred_fallthru
          _
        // Predicated region
        $region45: #{tpu_custom_call.1} parent=35 // pred_check
          %p268 = pneg %p87
        $region46: #{tpu_custom_call.1} parent=35 // pred_check_branch
          %270 = sbr.rel (%p268) target = $region48
        $region47: #{tpu_custom_call.1} parent=35 // pred_region
          %s271 = smul.u32 16, %s15
          %p272 = scmp.lt.s32.totalorder %s271, 47
          %s273 = scalar_select %p272, %s271, 47
          %s274 = smul.addr %s273, 8
          %s275 = scalar_lea.vmem %s2, %s274
          %s276 = smul.u32 16, %s15
        $region48: #{tpu_custom_call.1} parent=35 // pred_fallthru
          _
      $region36: #{tpu_custom_call.1} parent=5 // pred_fallthru
        _
      %p277 = scmp.le.s32.totalorder 1, %s15
      %p278 = scmp.lt.s32.totalorder %s15, 4
      %p279 = pnand %p277, %p278
      %p280 = pneg %p279
      // Predicated region
      $region49: #{tpu_custom_call.1} parent=5 // pred_check
        _
      $region50: #{tpu_custom_call.1} parent=5 // pred_check_branch
        %282 = sbr.rel (%p279) target = $region52
      $region51: #{tpu_custom_call.1} parent=5 // pred_region
        %s283 = ssub.s32 %s15, 1
        %s284 = smul.u32 16, %s20
        %p285 = scmp.lt.s32.totalorder %s284, 47
        %s286 = scalar_select %p285, %s284, 47
        %s287 = smul.addr %s286, 8
        %s288 = scalar_lea.vmem %s0, %s287
        %p289 = pneg %p41
        %p290 = pneg %p38
        %p291 = scmp.lt.s32.totalorder %s20, 2
        %s292 = scalar_select %p291, %s20, 2
        %s293 = scalar_lea.vmem %s1, %s292
        %p294 = pneg %p67
        %p295 = pneg %p64
        %s296 = smul.u32 16, %s20
        %p297 = scmp.lt.s32.totalorder %s296, 47
        %s298 = scalar_select %p297, %s296, 47
        %s299 = smul.addr %s298, 8
        %s300 = scalar_lea.vmem %s2, %s299
        %p301 = pneg %p93
        %p302 = pneg %p90
        %p303 = pneg %p114
        %p304 = pneg %p111
        %p305 = pneg %p135
        %p306 = pneg %p132
        %p307 = pneg %p156
        %p308 = pneg %p153
        %p309 = pneg %p177
        %p310 = pneg %p174
        %p311 = pneg %p198
        %p312 = pneg %p195
        %p313 = pneg %p219
        %p314 = pneg %p216
        %s315 = smul.u32 16, %s20
        %p316 = scmp.lt.s32.totalorder %s315, 47
        %s317 = scalar_select %p316, %s315, 47
        %s318 = smul.addr %s317, 8
        %s319 = scalar_lea.vmem %s0, %s318
        %s320 = smul.u32 16, %s20
        %p321 = scmp.lt.s32.totalorder %s20, 2
        %s322 = scalar_select %p321, %s20, 2
        %s323 = scalar_lea.vmem %s1, %s322
        %s324 = smul.u32 16, %s20
        %p325 = scmp.lt.s32.totalorder %s324, 47
        %s326 = scalar_select %p325, %s324, 47
        %s327 = smul.addr %s326, 8
        %s328 = scalar_lea.vmem %s2, %s327
        %s329 = smul.u32 16, %s20
        %p330 = scmp.eq.s32.totalorder %s20, 0
        // Predicated region
        $region53: #{tpu_custom_call.1} parent=51 // pred_check
          %p331 = pneg %p330
        $region54: #{tpu_custom_call.1} parent=51 // pred_check_branch
          %333 = sbr.rel (%p331) target = $region56
        $region55: #{tpu_custom_call.1} parent=51 // pred_region
          %334 = vst [vmem:[#allocation2] sm:$0xff] 0.0
          %335 = vst [vmem:[#allocation2 + $0x8] sm:$0xff] 0.0
          %336 = vst [vmem:[#allocation2 + $0x10] sm:$0xff] 0.0
          %337 = vst [vmem:[#allocation2 + $0x18] sm:$0xff] 0.0
          %338 = vst [vmem:[#allocation2 + $0x20] sm:$0xff] 0.0
          %339 = vst [vmem:[#allocation2 + $0x28] sm:$0xff] 0.0
          %340 = vst [vmem:[#allocation2 + $0x30] sm:$0xff] 0.0
          %341 = vst [vmem:[#allocation2 + $0x38] sm:$0xff] 0.0
        $region56: #{tpu_custom_call.1} parent=51 // pred_fallthru
          _
        %v342 = vld [vmem:[%s3] sm:$0xff]
        %v343 = vld [vmem:[%s3 + $0x8] sm:$0xff]
        %v344 = vld [vmem:[%s3 + $0x10] sm:$0xff]
        %v345 = vld [vmem:[%s3 + $0x18] sm:$0xff]
        %v346 = vld [vmem:[%s3 + $0x20] sm:$0xff]
        %v347 = vld [vmem:[%s3 + $0x28] sm:$0xff]
        %v348 = vld [vmem:[%s3 + $0x30] sm:$0xff]
        %v349 = vld [vmem:[%s3 + $0x38] sm:$0xff]
        %v350 = vld [vmem:[%s319] sm:$0xff]
        %v351 = vld [vmem:[%s319 + $0x8] sm:$0xff]
        %v352 = vld [vmem:[%s319 + $0x10] sm:$0xff]
        %v353 = vld [vmem:[%s319 + $0x18] sm:$0xff]
        %v354 = vld [vmem:[%s319 + $0x20] sm:$0xff]
        %v355 = vld [vmem:[%s319 + $0x28] sm:$0xff]
        %v356 = vld [vmem:[%s319 + $0x30] sm:$0xff]
        %v357 = vld [vmem:[%s319 + $0x38] sm:$0xff]
        %v358 = vld [vmem:[%s319 + $0x40] sm:$0xff]
        %v359 = vld [vmem:[%s319 + $0x48] sm:$0xff]
        %v360 = vld [vmem:[%s319 + $0x50] sm:$0xff]
        %v361 = vld [vmem:[%s319 + $0x58] sm:$0xff]
        %v362 = vld [vmem:[%s319 + $0x60] sm:$0xff]
        %v363 = vld [vmem:[%s319 + $0x68] sm:$0xff]
        %v364 = vld [vmem:[%s319 + $0x70] sm:$0xff]
        %v365 = vld [vmem:[%s319 + $0x78] sm:$0xff]
        %v366 = vld [vmem:[%s323] sm:$0x1]
        %v367 = vld [vmem:[%s328] sm:$0xff]
        %v368 = vld [vmem:[%s328 + $0x8] sm:$0xff]
        %v369 = vld [vmem:[%s328 + $0x10] sm:$0xff]
        %v370 = vld [vmem:[%s328 + $0x18] sm:$0xff]
        %v371 = vld [vmem:[%s328 + $0x20] sm:$0xff]
        %v372 = vld [vmem:[%s328 + $0x28] sm:$0xff]
        %v373 = vld [vmem:[%s328 + $0x30] sm:$0xff]
        %v374 = vld [vmem:[%s328 + $0x38] sm:$0xff]
        %v375 = vld [vmem:[%s328 + $0x40] sm:$0xff]
        %v376 = vld [vmem:[%s328 + $0x48] sm:$0xff]
        %v377 = vld [vmem:[%s328 + $0x50] sm:$0xff]
        %v378 = vld [vmem:[%s328 + $0x58] sm:$0xff]
        %v379 = vld [vmem:[%s328 + $0x60] sm:$0xff]
        %v380 = vld [vmem:[%s328 + $0x68] sm:$0xff]
        %v381 = vld [vmem:[%s328 + $0x70] sm:$0xff]
        %v382 = vld [vmem:[%s328 + $0x78] sm:$0xff]
        %v383 = vlaneseq
        %v384 = vand.u32 %v383, 127
        %385 = vset.pattern.permute.xlu0 0
        %386 = vperm.xlu0 %385, %v350
        %v387 = vpop.permute.xlu0 %386
        %388 = vset.pattern.permute.xlu0 0
        %389 = vperm.xlu0 %388, %v351
        %v390 = vpop.permute.xlu0 %389
        %391 = vset.pattern.permute.xlu0 0
        %392 = vperm.xlu0 %391, %v352
        %v393 = vpop.permute.xlu0 %392
        %394 = vset.pattern.permute.xlu0 0
        %395 = vperm.xlu0 %394, %v353
        %v396 = vpop.permute.xlu0 %395
        %397 = vset.pattern.permute.xlu0 0
        %398 = vperm.xlu0 %397, %v354
        %v399 = vpop.permute.xlu0 %398
        %400 = vset.pattern.permute.xlu0 0
        %401 = vperm.xlu0 %400, %v355
        %v402 = vpop.permute.xlu0 %401
        %403 = vset.pattern.permute.xlu0 0
        %404 = vperm.xlu0 %403, %v356
        %v405 = vpop.permute.xlu0 %404
        %406 = vset.pattern.permute.xlu0 0
        %407 = vperm.xlu0 %406, %v357
        %v408 = vpop.permute.xlu0 %407
        %409 = vset.pattern.permute.xlu0 0
        %410 = vperm.xlu0 %409, %v358
        %v411 = vpop.permute.xlu0 %410
        %412 = vset.pattern.permute.xlu0 0
        %413 = vperm.xlu0 %412, %v359
        %v414 = vpop.permute.xlu0 %413
        %415 = vset.pattern.permute.xlu0 0
        %416 = vperm.xlu0 %415, %v360
        %v417 = vpop.permute.xlu0 %416
        %418 = vset.pattern.permute.xlu0 0
        %419 = vperm.xlu0 %418, %v361
        %v420 = vpop.permute.xlu0 %419
        %421 = vset.pattern.permute.xlu0 0
        %422 = vperm.xlu0 %421, %v362
        %v423 = vpop.permute.xlu0 %422
        %424 = vset.pattern.permute.xlu0 0
        %425 = vperm.xlu0 %424, %v363
        %v426 = vpop.permute.xlu0 %425
        %427 = vset.pattern.permute.xlu0 0
        %428 = vperm.xlu0 %427, %v364
        %v429 = vpop.permute.xlu0 %428
        %430 = vset.pattern.permute.xlu0 0
        %431 = vperm.xlu0 %430, %v365
        %v432 = vpop.permute.xlu0 %431
        %vm433 = vcmp.eq.s32.totalorder %v384, %v387
        %vm434 = vcmp.eq.s32.totalorder %v384, %v390
        %vm435 = vcmp.eq.s32.totalorder %v384, %v393
        %vm436 = vcmp.eq.s32.totalorder %v384, %v396
        %vm437 = vcmp.eq.s32.totalorder %v384, %v399
        %vm438 = vcmp.eq.s32.totalorder %v384, %v402
        %vm439 = vcmp.eq.s32.totalorder %v384, %v405
        %vm440 = vcmp.eq.s32.totalorder %v384, %v408
        %vm441 = vcmp.eq.s32.totalorder %v384, %v411
        %vm442 = vcmp.eq.s32.totalorder %v384, %v414
        %vm443 = vcmp.eq.s32.totalorder %v384, %v417
        %vm444 = vcmp.eq.s32.totalorder %v384, %v420
        %vm445 = vcmp.eq.s32.totalorder %v384, %v423
        %vm446 = vcmp.eq.s32.totalorder %v384, %v426
        %vm447 = vcmp.eq.s32.totalorder %v384, %v429
        %vm448 = vcmp.eq.s32.totalorder %v384, %v432
        %v449 = vsel %vm433, 1, 0
        %v450 = vsel %vm434, 1, 0
        %v451 = vsel %vm435, 1, 0
        %v452 = vsel %vm436, 1, 0
        %v453 = vsel %vm437, 1, 0
        %v454 = vsel %vm438, 1, 0
        %v455 = vsel %vm439, 1, 0
        %v456 = vsel %vm440, 1, 0
        %v457 = vsel %vm441, 1, 0
        %v458 = vsel %vm442, 1, 0
        %v459 = vsel %vm443, 1, 0
        %v460 = vsel %vm444, 1, 0
        %v461 = vsel %vm445, 1, 0
        %v462 = vsel %vm446, 1, 0
        %v463 = vsel %vm447, 1, 0
        %v464 = vsel %vm448, 1, 0
        %v465 = vcvt.s32.f32 %v449
        %v466 = vcvt.s32.f32 %v450
        %v467 = vcvt.s32.f32 %v451
        %v468 = vcvt.s32.f32 %v452
        %v469 = vcvt.s32.f32 %v453
        %v470 = vcvt.s32.f32 %v454
        %v471 = vcvt.s32.f32 %v455
        %v472 = vcvt.s32.f32 %v456
        %v473 = vcvt.s32.f32 %v457
        %v474 = vcvt.s32.f32 %v458
        %v475 = vcvt.s32.f32 %v459
        %v476 = vcvt.s32.f32 %v460
        %v477 = vcvt.s32.f32 %v461
        %v478 = vcvt.s32.f32 %v462
        %v479 = vcvt.s32.f32 %v463
        %v480 = vcvt.s32.f32 %v464
        %vm481 = vcmask 523264
        %v483 = vsel %vm481, %v465, 0
        %v486 = vsel %vm481, %v466, 0
        %v489 = vsel %vm481, %v467, 0
        %v492 = vsel %vm481, %v468, 0
        %v495 = vsel %vm481, %v469, 0
        %v498 = vsel %vm481, %v470, 0
        %v501 = vsel %vm481, %v471, 0
        %v504 = vsel %vm481, %v472, 0
        %v507 = vsel %vm481, %v473, 0
        %v510 = vsel %vm481, %v474, 0
        %v513 = vsel %vm481, %v475, 0
        %v516 = vsel %vm481, %v476, 0
        %v519 = vsel %vm481, %v477, 0
        %v522 = vsel %vm481, %v478, 0
        %v525 = vsel %vm481, %v479, 0
        %v528 = vsel %vm481, %v480, 0
        %530 = vmatprep.subr.mxu0 0.0
        %531 = vmatpush1.msra.mxu0 %v342
        %532 = vmatprep.subr.mxu0 0.0
        %533 = vmatpush1.msra.mxu0 %v343
        %534 = vmatprep.subr.mxu0 0.0
        %535 = vmatpush1.msra.mxu0 %v344
        %536 = vmatprep.subr.mxu0 0.0
        %537 = vmatpush1.msra.mxu0 %v345
        %538 = vmatprep.subr.mxu0 0.0
        %539 = vmatpush1.msra.mxu0 %v346
        %540 = vmatprep.subr.mxu0 0.0
        %541 = vmatpush1.msra.mxu0 %v347
        %542 = vmatprep.subr.mxu0 0.0
        %543 = vmatpush1.msra.mxu0 %v348
        %544 = vmatprep.subr.mxu0 0.0
        %545 = vmatpush1.msra.mxu0 %v349
        %546 = vmatprep.subr.mxu0 0.0
        %547 = vmatpush1.msra.mxu0 0.0
        %548 = vmatprep.subr.mxu0 0.0
        %549 = vmatpush1.msra.mxu0 0.0
        %550 = vmatprep.subr.mxu0 0.0
        %551 = vmatpush1.msra.mxu0 0.0
        %552 = vmatprep.subr.mxu0 0.0
        %553 = vmatpush1.msra.mxu0 0.0
        %554 = vmatprep.subr.mxu0 0.0
        %555 = vmatpush1.msra.mxu0 0.0
        %556 = vmatprep.subr.mxu0 0.0
        %557 = vmatpush1.msra.mxu0 0.0
        %558 = vmatprep.subr.mxu0 0.0
        %559 = vmatpush1.msra.mxu0 0.0
        %560 = vmatprep.subr.mxu0 0.0
        %561 = vmatpush1.msra.mxu0 0.0
        %562 = vmatprep.subr.mxu0 0.0
        %563 = vmatpush1.msra.mxu0 0.0
        %564 = vmatprep.subr.mxu0 0.0
        %565 = vmatpush1.msra.mxu0 0.0
        %566 = vmatprep.subr.mxu0 0.0
        %567 = vmatpush1.msra.mxu0 0.0
        %568 = vmatprep.subr.mxu0 0.0
        %569 = vmatpush1.msra.mxu0 0.0
        %570 = vmatprep.subr.mxu0 0.0
        %571 = vmatpush1.msra.mxu0 0.0
        %572 = vmatprep.subr.mxu0 0.0
        %573 = vmatpush1.msra.mxu0 0.0
        %574 = vmatprep.subr.mxu0 0.0
        %575 = vmatpush1.msra.mxu0 0.0
        %576 = vmatprep.subr.mxu0 0.0
        %577 = vmatpush1.msra.mxu0 0.0
        %578 = vmatprep.subr.mxu0 0.0
        %579 = vmatpush1.msra.mxu0 0.0
        %580 = vmatprep.subr.mxu0 0.0
        %581 = vmatpush1.msra.mxu0 0.0
        %582 = vmatprep.subr.mxu0 0.0
        %583 = vmatpush1.msra.mxu0 0.0
        %584 = vmatprep.subr.mxu0 0.0
        %585 = vmatpush1.msra.mxu0 0.0
        %586 = vmatprep.subr.mxu0 0.0
        %587 = vmatpush1.msra.mxu0 0.0
        %588 = vmatprep.subr.mxu0 0.0
        %589 = vmatpush1.msra.mxu0 0.0
        %590 = vmatprep.subr.mxu0 0.0
        %591 = vmatpush1.msra.mxu0 0.0
        %592 = vmatprep.subr.mxu0 0.0
        %593 = vmatpush1.msra.mxu0 0.0
        %594 = vmatprep.mubr.f32.mxu0 0.0
        %595 = vmatmul.mubr.f32.gmra.mrb[0].mxu0 %v483
        %v596 = vpop.f32.mrb[0].mxu0
        %v597 = vadd.f32 0.0, %v596
        %v598 = vpop.f32.mrb[0].mxu0
        %599 = vmatprep.mubr.f32.mxu0 0.0
        %600 = vmatmul.mubr.f32.gmra.mrb[0].mxu0 %v486
        %v601 = vpop.f32.mrb[0].mxu0
        %v602 = vadd.f32 0.0, %v601
        %v603 = vpop.f32.mrb[0].mxu0
        %604 = vmatprep.mubr.f32.mxu0 0.0
        %605 = vmatmul.mubr.f32.gmra.mrb[0].mxu0 %v489
        %v606 = vpop.f32.mrb[0].mxu0
        %v607 = vadd.f32 0.0, %v606
        %v608 = vpop.f32.mrb[0].mxu0
        %609 = vmatprep.mubr.f32.mxu0 0.0
        %610 = vmatmul.mubr.f32.gmra.mrb[0].mxu0 %v492
        %v611 = vpop.f32.mrb[0].mxu0
        %v612 = vadd.f32 0.0, %v611
        %v613 = vpop.f32.mrb[0].mxu0
        %614 = vmatprep.mubr.f32.mxu0 0.0
        %615 = vmatmul.mubr.f32.gmra.mrb[0].mxu0 %v495
        %v616 = vpop.f32.mrb[0].mxu0
        %v617 = vadd.f32 0.0, %v616
        %v618 = vpop.f32.mrb[0].mxu0
        %619 = vmatprep.mubr.f32.mxu0 0.0
        %620 = vmatmul.mubr.f32.gmra.mrb[0].mxu0 %v498
        %v621 = vpop.f32.mrb[0].mxu0
        %v622 = vadd.f32 0.0, %v621
        %v623 = vpop.f32.mrb[0].mxu0
        %624 = vmatprep.mubr.f32.mxu0 0.0
        %625 = vmatmul.mubr.f32.gmra.mrb[0].mxu0 %v501
        %v626 = vpop.f32.mrb[0].mxu0
        %v627 = vadd.f32 0.0, %v626
        %v628 = vpop.f32.mrb[0].mxu0
        %629 = vmatprep.mubr.f32.mxu0 0.0
        %630 = vmatmul.mubr.f32.gmra.mrb[0].mxu0 %v504
        %v631 = vpop.f32.mrb[0].mxu0
        %v632 = vadd.f32 0.0, %v631
        %v633 = vpop.f32.mrb[0].mxu0
        %634 = vmatprep.mubr.f32.mxu0 0.0
        %635 = vmatmul.mubr.f32.gmra.mrb[0].mxu0 %v507
        %v636 = vpop.f32.mrb[0].mxu0
        %v637 = vadd.f32 0.0, %v636
        %v638 = vpop.f32.mrb[0].mxu0
        %639 = vmatprep.mubr.f32.mxu0 0.0
        %640 = vmatmul.mubr.f32.gmra.mrb[0].mxu0 %v510
        %v641 = vpop.f32.mrb[0].mxu0
        %v642 = vadd.f32 0.0, %v641
        %v643 = vpop.f32.mrb[0].mxu0
        %644 = vmatprep.mubr.f32.mxu0 0.0
        %645 = vmatmul.mubr.f32.gmra.mrb[0].mxu0 %v513
        %v646 = vpop.f32.mrb[0].mxu0
        %v647 = vadd.f32 0.0, %v646
        %v648 = vpop.f32.mrb[0].mxu0
        %649 = vmatprep.mubr.f32.mxu0 0.0
        %650 = vmatmul.mubr.f32.gmra.mrb[0].mxu0 %v516
        %v651 = vpop.f32.mrb[0].mxu0
        %v652 = vadd.f32 0.0, %v651
        %v653 = vpop.f32.mrb[0].mxu0
        %654 = vmatprep.mubr.f32.mxu0 0.0
        %655 = vmatmul.mubr.f32.gmra.mrb[0].mxu0 %v519
        %v656 = vpop.f32.mrb[0].mxu0
        %v657 = vadd.f32 0.0, %v656
        %v658 = vpop.f32.mrb[0].mxu0
        %659 = vmatprep.mubr.f32.mxu0 0.0
        %660 = vmatmul.mubr.f32.gmra.mrb[0].mxu0 %v522
        %v661 = vpop.f32.mrb[0].mxu0
        %v662 = vadd.f32 0.0, %v661
        %v663 = vpop.f32.mrb[0].mxu0
        %664 = vmatprep.mubr.f32.mxu0 0.0
        %665 = vmatmul.mubr.f32.gmra.mrb[0].mxu0 %v525
        %v666 = vpop.f32.mrb[0].mxu0
        %v667 = vadd.f32 0.0, %v666
        %v668 = vpop.f32.mrb[0].mxu0
        %669 = vmatprep.mubr.f32.mxu0 0.0
        %670 = vmatmul.mubr.f32.gmra.mrb[0].mxu0 %v528
        %v671 = vpop.f32.mrb[0].mxu0
        %v672 = vadd.f32 0.0, %v671
        %v673 = vpop.f32.mrb[0].mxu0
        %674 = vdwg.mxu0
        %v675 = vmul.f32 %v367, 4.0
        %v676 = vmul.f32 %v368, 4.0
        %v677 = vmul.f32 %v369, 4.0
        %v678 = vmul.f32 %v370, 4.0
        %v679 = vmul.f32 %v371, 4.0
        %v680 = vmul.f32 %v372, 4.0
        %v681 = vmul.f32 %v373, 4.0
        %v682 = vmul.f32 %v374, 4.0
        %v683 = vmul.f32 %v375, 4.0
        %v684 = vmul.f32 %v376, 4.0
        %v685 = vmul.f32 %v377, 4.0
        %v686 = vmul.f32 %v378, 4.0
        %v687 = vmul.f32 %v379, 4.0
        %v688 = vmul.f32 %v380, 4.0
        %v689 = vmul.f32 %v381, 4.0
        %v690 = vmul.f32 %v382, 4.0
        %v691 = vfloor.f32 %v675
        %v692 = vfloor.f32 %v676
        %v693 = vfloor.f32 %v677
        %v694 = vfloor.f32 %v678
        %v695 = vfloor.f32 %v679
        %v696 = vfloor.f32 %v680
        %v697 = vfloor.f32 %v681
        %v698 = vfloor.f32 %v682
        %v699 = vfloor.f32 %v683
        %v700 = vfloor.f32 %v684
        %v701 = vfloor.f32 %v685
        %v702 = vfloor.f32 %v686
        %v703 = vfloor.f32 %v687
        %v704 = vfloor.f32 %v688
        %v705 = vfloor.f32 %v689
        %v706 = vfloor.f32 %v690
        %v707 = vsub.f32 %v675, %v691
        %v708 = vsub.f32 %v676, %v692
        %v709 = vsub.f32 %v677, %v693
        %v710 = vsub.f32 %v678, %v694
        %v711 = vsub.f32 %v679, %v695
        %v712 = vsub.f32 %v680, %v696
        %v713 = vsub.f32 %v681, %v697
        %v714 = vsub.f32 %v682, %v698
        %v715 = vsub.f32 %v683, %v699
        %v716 = vsub.f32 %v684, %v700
        %v717 = vsub.f32 %v685, %v701
        %v718 = vsub.f32 %v686, %v702
        %v719 = vsub.f32 %v687, %v703
        %v720 = vsub.f32 %v688, %v704
        %v721 = vsub.f32 %v689, %v705
        %v722 = vsub.f32 %v690, %v706
        %v723 = vcvt.f32.s32.to.zero.pseudo %v691
        %v724 = vcvt.f32.s32.to.zero.pseudo %v692
        %v725 = vcvt.f32.s32.to.zero.pseudo %v693
        %v726 = vcvt.f32.s32.to.zero.pseudo %v694
        %v727 = vcvt.f32.s32.to.zero.pseudo %v695
        %v728 = vcvt.f32.s32.to.zero.pseudo %v696
        %v729 = vcvt.f32.s32.to.zero.pseudo %v697
        %v730 = vcvt.f32.s32.to.zero.pseudo %v698
        %v731 = vcvt.f32.s32.to.zero.pseudo %v699
        %v732 = vcvt.f32.s32.to.zero.pseudo %v700
        %v733 = vcvt.f32.s32.to.zero.pseudo %v701
        %v734 = vcvt.f32.s32.to.zero.pseudo %v702
        %v735 = vcvt.f32.s32.to.zero.pseudo %v703
        %v736 = vcvt.f32.s32.to.zero.pseudo %v704
        %v737 = vcvt.f32.s32.to.zero.pseudo %v705
        %v738 = vcvt.f32.s32.to.zero.pseudo %v706
        %v739 = vld [vmem:[%s5] sm:$0x1]
        %v740 = vsub.f32 1.0, %v707
        %v741 = vsub.f32 1.0, %v708
        %v742 = vsub.f32 1.0, %v709
        %v743 = vsub.f32 1.0, %v710
        %v744 = vsub.f32 1.0, %v711
        %v745 = vsub.f32 1.0, %v712
        %v746 = vsub.f32 1.0, %v713
        %v747 = vsub.f32 1.0, %v714
        %v748 = vsub.f32 1.0, %v715
        %v749 = vsub.f32 1.0, %v716
        %v750 = vsub.f32 1.0, %v717
        %v751 = vsub.f32 1.0, %v718
        %v752 = vsub.f32 1.0, %v719
        %v753 = vsub.f32 1.0, %v720
        %v754 = vsub.f32 1.0, %v721
        %v755 = vsub.f32 1.0, %v722
        %772 = vrot.lane.b32.xlu0 %v740, 127
        %v773 = vpop.permute.xlu0 %772
        %774 = vrot.lane.b32.xlu0 %v741, 127
        %v775 = vpop.permute.xlu0 %774
        %776 = vrot.lane.b32.xlu0 %v742, 127
        %v777 = vpop.permute.xlu0 %776
        %778 = vrot.lane.b32.xlu0 %v743, 127
        %v779 = vpop.permute.xlu0 %778
        %780 = vrot.lane.b32.xlu0 %v744, 127
        %v781 = vpop.permute.xlu0 %780
        %782 = vrot.lane.b32.xlu0 %v745, 127
        %v783 = vpop.permute.xlu0 %782
        %784 = vrot.lane.b32.xlu0 %v746, 127
        %v785 = vpop.permute.xlu0 %784
        %786 = vrot.lane.b32.xlu0 %v747, 127
        %v787 = vpop.permute.xlu0 %786
        %788 = vrot.lane.b32.xlu0 %v748, 127
        %v789 = vpop.permute.xlu0 %788
        %790 = vrot.lane.b32.xlu0 %v749, 127
        %v791 = vpop.permute.xlu0 %790
        %792 = vrot.lane.b32.xlu0 %v750, 127
        %v793 = vpop.permute.xlu0 %792
        %794 = vrot.lane.b32.xlu0 %v751, 127
        %v795 = vpop.permute.xlu0 %794
        %796 = vrot.lane.b32.xlu0 %v752, 127
        %v797 = vpop.permute.xlu0 %796
        %798 = vrot.lane.b32.xlu0 %v753, 127
        %v799 = vpop.permute.xlu0 %798
        %800 = vrot.lane.b32.xlu0 %v754, 127
        %v801 = vpop.permute.xlu0 %800
        %802 = vrot.lane.b32.xlu0 %v755, 127
        %v803 = vpop.permute.xlu0 %802
        %v820 = vmul.f32 %v740, %v773
        %v821 = vmul.f32 %v741, %v775
        %v822 = vmul.f32 %v742, %v777
        %v823 = vmul.f32 %v743, %v779
        %v824 = vmul.f32 %v744, %v781
        %v825 = vmul.f32 %v745, %v783
        %v826 = vmul.f32 %v746, %v785
        %v827 = vmul.f32 %v747, %v787
        %v828 = vmul.f32 %v748, %v789
        %v829 = vmul.f32 %v749, %v791
        %v830 = vmul.f32 %v750, %v793
        %v831 = vmul.f32 %v751, %v795
        %v832 = vmul.f32 %v752, %v797
        %v833 = vmul.f32 %v753, %v799
        %v834 = vmul.f32 %v754, %v801
        %v835 = vmul.f32 %v755, %v803
        %vm836 = vcmp.ge.s32.totalorder %v723, 5
        %vm837 = vcmp.ge.s32.totalorder %v724, 5
        %vm838 = vcmp.ge.s32.totalorder %v725, 5
        %vm839 = vcmp.ge.s32.totalorder %v726, 5
        %vm840 = vcmp.ge.s32.totalorder %v727, 5
        %vm841 = vcmp.ge.s32.totalorder %v728, 5
        %vm842 = vcmp.ge.s32.totalorder %v729, 5
        %vm843 = vcmp.ge.s32.totalorder %v730, 5
        %vm844 = vcmp.ge.s32.totalorder %v731, 5
        %vm845 = vcmp.ge.s32.totalorder %v732, 5
        %vm846 = vcmp.ge.s32.totalorder %v733, 5
        %vm847 = vcmp.ge.s32.totalorder %v734, 5
        %vm848 = vcmp.ge.s32.totalorder %v735, 5
        %vm849 = vcmp.ge.s32.totalorder %v736, 5
        %vm850 = vcmp.ge.s32.totalorder %v737, 5
        %vm851 = vcmp.ge.s32.totalorder %v738, 5
        %v852 = vsub.s32 %v723, 5
        %v853 = vsub.s32 %v724, 5
        %v854 = vsub.s32 %v725, 5
        %v855 = vsub.s32 %v726, 5
        %v856 = vsub.s32 %v727, 5
        %v857 = vsub.s32 %v728, 5
        %v858 = vsub.s32 %v729, 5
        %v859 = vsub.s32 %v730, 5
        %v860 = vsub.s32 %v731, 5
        %v861 = vsub.s32 %v732, 5
        %v862 = vsub.s32 %v733, 5
        %v863 = vsub.s32 %v734, 5
        %v864 = vsub.s32 %v735, 5
        %v865 = vsub.s32 %v736, 5
        %v866 = vsub.s32 %v737, 5
        %v867 = vsub.s32 %v738, 5
        %v868 = vsel %vm836, %v852, %v723
        %v869 = vsel %vm837, %v853, %v724
        %v870 = vsel %vm838, %v854, %v725
        %v871 = vsel %vm839, %v855, %v726
        %v872 = vsel %vm840, %v856, %v727
        %v873 = vsel %vm841, %v857, %v728
        %v874 = vsel %vm842, %v858, %v729
        %v875 = vsel %vm843, %v859, %v730
        %v876 = vsel %vm844, %v860, %v731
        %v877 = vsel %vm845, %v861, %v732
        %v878 = vsel %vm846, %v862, %v733
        %v879 = vsel %vm847, %v863, %v734
        %v880 = vsel %vm848, %v864, %v735
        %v881 = vsel %vm849, %v865, %v736
        %v882 = vsel %vm850, %v866, %v737
        %v883 = vsel %vm851, %v867, %v738
        %v884 = vmul.u32 %v868, 5
        %v885 = vmul.u32 %v869, 5
        %v886 = vmul.u32 %v870, 5
        %v887 = vmul.u32 %v871, 5
        %v888 = vmul.u32 %v872, 5
        %v889 = vmul.u32 %v873, 5
        %v890 = vmul.u32 %v874, 5
        %v891 = vmul.u32 %v875, 5
        %v892 = vmul.u32 %v876, 5
        %v893 = vmul.u32 %v877, 5
        %v894 = vmul.u32 %v878, 5
        %v895 = vmul.u32 %v879, 5
        %v896 = vmul.u32 %v880, 5
        %v897 = vmul.u32 %v881, 5
        %v898 = vmul.u32 %v882, 5
        %v899 = vmul.u32 %v883, 5
        %900 = vrot.lane.b32.xlu0 %v884, 127
        %v901 = vpop.permute.xlu0 %900
        %902 = vrot.lane.b32.xlu0 %v885, 127
        %v903 = vpop.permute.xlu0 %902
        %904 = vrot.lane.b32.xlu0 %v886, 127
        %v905 = vpop.permute.xlu0 %904
        %906 = vrot.lane.b32.xlu0 %v887, 127
        %v907 = vpop.permute.xlu0 %906
        %908 = vrot.lane.b32.xlu0 %v888, 127
        %v909 = vpop.permute.xlu0 %908
        %910 = vrot.lane.b32.xlu0 %v889, 127
        %v911 = vpop.permute.xlu0 %910
        %912 = vrot.lane.b32.xlu0 %v890, 127
        %v913 = vpop.permute.xlu0 %912
        %914 = vrot.lane.b32.xlu0 %v891, 127
        %v915 = vpop.permute.xlu0 %914
        %916 = vrot.lane.b32.xlu0 %v892, 127
        %v917 = vpop.permute.xlu0 %916
        %918 = vrot.lane.b32.xlu0 %v893, 127
        %v919 = vpop.permute.xlu0 %918
        %920 = vrot.lane.b32.xlu0 %v894, 127
        %v921 = vpop.permute.xlu0 %920
        %922 = vrot.lane.b32.xlu0 %v895, 127
        %v923 = vpop.permute.xlu0 %922
        %924 = vrot.lane.b32.xlu0 %v896, 127
        %v925 = vpop.permute.xlu0 %924
        %926 = vrot.lane.b32.xlu0 %v897, 127
        %v927 = vpop.permute.xlu0 %926
        %928 = vrot.lane.b32.xlu0 %v898, 127
        %v929 = vpop.permute.xlu0 %928
        %930 = vrot.lane.b32.xlu0 %v899, 127
        %v931 = vpop.permute.xlu0 %930
        %v932 = vadd.s32 %v868, %v901
        %v933 = vadd.s32 %v869, %v903
        %v934 = vadd.s32 %v870, %v905
        %v935 = vadd.s32 %v871, %v907
        %v936 = vadd.s32 %v872, %v909
        %v937 = vadd.s32 %v873, %v911
        %v938 = vadd.s32 %v874, %v913
        %v939 = vadd.s32 %v875, %v915
        %v940 = vadd.s32 %v876, %v917
        %v941 = vadd.s32 %v877, %v919
        %v942 = vadd.s32 %v878, %v921
        %v943 = vadd.s32 %v879, %v923
        %v944 = vadd.s32 %v880, %v925
        %v945 = vadd.s32 %v881, %v927
        %v946 = vadd.s32 %v882, %v929
        %v947 = vadd.s32 %v883, %v931
        %948 = vset.pattern.permute.xlu0 0
        %949 = vperm.xlu0 %948, %v932
        %v950 = vpop.permute.xlu0 %949
        %951 = vset.pattern.permute.xlu0 0
        %952 = vperm.xlu0 %951, %v933
        %v953 = vpop.permute.xlu0 %952
        %954 = vset.pattern.permute.xlu0 0
        %955 = vperm.xlu0 %954, %v934
        %v956 = vpop.permute.xlu0 %955
        %957 = vset.pattern.permute.xlu0 0
        %958 = vperm.xlu0 %957, %v935
        %v959 = vpop.permute.xlu0 %958
        %960 = vset.pattern.permute.xlu0 0
        %961 = vperm.xlu0 %960, %v936
        %v962 = vpop.permute.xlu0 %961
        %963 = vset.pattern.permute.xlu0 0
        %964 = vperm.xlu0 %963, %v937
        %v965 = vpop.permute.xlu0 %964
        %966 = vset.pattern.permute.xlu0 0
        %967 = vperm.xlu0 %966, %v938
        %v968 = vpop.permute.xlu0 %967
        %969 = vset.pattern.permute.xlu0 0
        %970 = vperm.xlu0 %969, %v939
        %v971 = vpop.permute.xlu0 %970
        %972 = vset.pattern.permute.xlu0 0
        %973 = vperm.xlu0 %972, %v940
        %v974 = vpop.permute.xlu0 %973
        %975 = vset.pattern.permute.xlu0 0
        %976 = vperm.xlu0 %975, %v941
        %v977 = vpop.permute.xlu0 %976
        %978 = vset.pattern.permute.xlu0 0
        %979 = vperm.xlu0 %978, %v942
        %v980 = vpop.permute.xlu0 %979
        %981 = vset.pattern.permute.xlu0 0
        %982 = vperm.xlu0 %981, %v943
        %v983 = vpop.permute.xlu0 %982
        %984 = vset.pattern.permute.xlu0 0
        %985 = vperm.xlu0 %984, %v944
        %v986 = vpop.permute.xlu0 %985
        %987 = vset.pattern.permute.xlu0 0
        %988 = vperm.xlu0 %987, %v945
        %v989 = vpop.permute.xlu0 %988
        %990 = vset.pattern.permute.xlu0 0
        %991 = vperm.xlu0 %990, %v946
        %v992 = vpop.permute.xlu0 %991
        %993 = vset.pattern.permute.xlu0 0
        %994 = vperm.xlu0 %993, %v947
        %v995 = vpop.permute.xlu0 %994
        %v996 = vlaneseq
        %v997 = vshrl.u32 %v996, 7
        %v998 = vsub.s32 0, %v997
        %v999 = vrot.slane %v739, %v998
        %vm1000 = vcmp.eq.s32.totalorder %v950, %v999
        %vm1001 = vcmp.eq.s32.totalorder %v953, %v999
        %vm1002 = vcmp.eq.s32.totalorder %v956, %v999
        %vm1003 = vcmp.eq.s32.totalorder %v959, %v999
        %vm1004 = vcmp.eq.s32.totalorder %v962, %v999
        %vm1005 = vcmp.eq.s32.totalorder %v965, %v999
        %vm1006 = vcmp.eq.s32.totalorder %v968, %v999
        %vm1007 = vcmp.eq.s32.totalorder %v971, %v999
        %vm1008 = vcmp.eq.s32.totalorder %v974, %v999
        %vm1009 = vcmp.eq.s32.totalorder %v977, %v999
        %vm1010 = vcmp.eq.s32.totalorder %v980, %v999
        %vm1011 = vcmp.eq.s32.totalorder %v983, %v999
        %vm1012 = vcmp.eq.s32.totalorder %v986, %v999
        %vm1013 = vcmp.eq.s32.totalorder %v989, %v999
        %vm1014 = vcmp.eq.s32.totalorder %v992, %v999
        %vm1015 = vcmp.eq.s32.totalorder %v995, %v999
        %1017 = vset.pattern.permute.xlu0 0
        %1018 = vperm.xlu0 %1017, %v820
        %v1019 = vpop.permute.xlu0 %1018
        %1022 = vset.pattern.permute.xlu0 0
        %1023 = vperm.xlu0 %1022, %v821
        %v1024 = vpop.permute.xlu0 %1023
        %1027 = vset.pattern.permute.xlu0 0
        %1028 = vperm.xlu0 %1027, %v822
        %v1029 = vpop.permute.xlu0 %1028
        %1032 = vset.pattern.permute.xlu0 0
        %1033 = vperm.xlu0 %1032, %v823
        %v1034 = vpop.permute.xlu0 %1033
        %1037 = vset.pattern.permute.xlu0 0
        %1038 = vperm.xlu0 %1037, %v824
        %v1039 = vpop.permute.xlu0 %1038
        %1042 = vset.pattern.permute.xlu0 0
        %1043 = vperm.xlu0 %1042, %v825
        %v1044 = vpop.permute.xlu0 %1043
        %1047 = vset.pattern.permute.xlu0 0
        %1048 = vperm.xlu0 %1047, %v826
        %v1049 = vpop.permute.xlu0 %1048
        %1052 = vset.pattern.permute.xlu0 0
        %1053 = vperm.xlu0 %1052, %v827
        %v1054 = vpop.permute.xlu0 %1053
        %1057 = vset.pattern.permute.xlu0 0
        %1058 = vperm.xlu0 %1057, %v828
        %v1059 = vpop.permute.xlu0 %1058
        %1062 = vset.pattern.permute.xlu0 0
        %1063 = vperm.xlu0 %1062, %v829
        %v1064 = vpop.permute.xlu0 %1063
        %1067 = vset.pattern.permute.xlu0 0
        %1068 = vperm.xlu0 %1067, %v830
        %v1069 = vpop.permute.xlu0 %1068
        %1072 = vset.pattern.permute.xlu0 0
        %1073 = vperm.xlu0 %1072, %v831
        %v1074 = vpop.permute.xlu0 %1073
        %1077 = vset.pattern.permute.xlu0 0
        %1078 = vperm.xlu0 %1077, %v832
        %v1079 = vpop.permute.xlu0 %1078
        %1082 = vset.pattern.permute.xlu0 0
        %1083 = vperm.xlu0 %1082, %v833
        %v1084 = vpop.permute.xlu0 %1083
        %1087 = vset.pattern.permute.xlu0 0
        %1088 = vperm.xlu0 %1087, %v834
        %v1089 = vpop.permute.xlu0 %1088
        %1092 = vset.pattern.permute.xlu0 0
        %1093 = vperm.xlu0 %1092, %v835
        %v1094 = vpop.permute.xlu0 %1093
        %v1096 = vsel %vm1000, %v1019, 0.0
        %v1097 = vsel %vm1001, %v1024, 0.0
        %v1098 = vsel %vm1002, %v1029, 0.0
        %v1099 = vsel %vm1003, %v1034, 0.0
        %v1100 = vsel %vm1004, %v1039, 0.0
        %v1101 = vsel %vm1005, %v1044, 0.0
        %v1102 = vsel %vm1006, %v1049, 0.0
        %v1103 = vsel %vm1007, %v1054, 0.0
        %v1104 = vsel %vm1008, %v1059, 0.0
        %v1105 = vsel %vm1009, %v1064, 0.0
        %v1106 = vsel %vm1010, %v1069, 0.0
        %v1107 = vsel %vm1011, %v1074, 0.0
        %v1108 = vsel %vm1012, %v1079, 0.0
        %v1109 = vsel %vm1013, %v1084, 0.0
        %v1110 = vsel %vm1014, %v1089, 0.0
        %v1111 = vsel %vm1015, %v1094, 0.0
        %v1112 = vadd.f32 %v1096, 0.0
        %v1113 = vadd.f32 %v1097, 0.0
        %v1114 = vadd.f32 %v1098, 0.0
        %v1115 = vadd.f32 %v1099, 0.0
        %v1116 = vadd.f32 %v1100, 0.0
        %v1117 = vadd.f32 %v1101, 0.0
        %v1118 = vadd.f32 %v1102, 0.0
        %v1119 = vadd.f32 %v1103, 0.0
        %v1120 = vadd.f32 %v1104, 0.0
        %v1121 = vadd.f32 %v1105, 0.0
        %v1122 = vadd.f32 %v1106, 0.0
        %v1123 = vadd.f32 %v1107, 0.0
        %v1124 = vadd.f32 %v1108, 0.0
        %v1125 = vadd.f32 %v1109, 0.0
        %v1126 = vadd.f32 %v1110, 0.0
        %v1127 = vadd.f32 %v1111, 0.0
        %v1128 = vmul.f32 %v707, %v773
        %v1129 = vmul.f32 %v708, %v775
        %v1130 = vmul.f32 %v709, %v777
        %v1131 = vmul.f32 %v710, %v779
        %v1132 = vmul.f32 %v711, %v781
        %v1133 = vmul.f32 %v712, %v783
        %v1134 = vmul.f32 %v713, %v785
        %v1135 = vmul.f32 %v714, %v787
        %v1136 = vmul.f32 %v715, %v789
        %v1137 = vmul.f32 %v716, %v791
        %v1138 = vmul.f32 %v717, %v793
        %v1139 = vmul.f32 %v718, %v795
        %v1140 = vmul.f32 %v719, %v797
        %v1141 = vmul.f32 %v720, %v799
        %v1142 = vmul.f32 %v721, %v801
        %v1143 = vmul.f32 %v722, %v803
        %v1144 = vadd.s32 %v723, 1
        %v1145 = vadd.s32 %v724, 1
        %v1146 = vadd.s32 %v725, 1
        %v1147 = vadd.s32 %v726, 1
        %v1148 = vadd.s32 %v727, 1
        %v1149 = vadd.s32 %v728, 1
        %v1150 = vadd.s32 %v729, 1
        %v1151 = vadd.s32 %v730, 1
        %v1152 = vadd.s32 %v731, 1
        %v1153 = vadd.s32 %v732, 1
        %v1154 = vadd.s32 %v733, 1
        %v1155 = vadd.s32 %v734, 1
        %v1156 = vadd.s32 %v735, 1
        %v1157 = vadd.s32 %v736, 1
        %v1158 = vadd.s32 %v737, 1
        %v1159 = vadd.s32 %v738, 1
        %vm1160 = vcmp.ge.s32.totalorder %v1144, 5
        %vm1161 = vcmp.ge.s32.totalorder %v1145, 5
        %vm1162 = vcmp.ge.s32.totalorder %v1146, 5
        %vm1163 = vcmp.ge.s32.totalorder %v1147, 5
        %vm1164 = vcmp.ge.s32.totalorder %v1148, 5
        %vm1165 = vcmp.ge.s32.totalorder %v1149, 5
        %vm1166 = vcmp.ge.s32.totalorder %v1150, 5
        %vm1167 = vcmp.ge.s32.totalorder %v1151, 5
        %vm1168 = vcmp.ge.s32.totalorder %v1152, 5
        %vm1169 = vcmp.ge.s32.totalorder %v1153, 5
        %vm1170 = vcmp.ge.s32.totalorder %v1154, 5
        %vm1171 = vcmp.ge.s32.totalorder %v1155, 5
        %vm1172 = vcmp.ge.s32.totalorder %v1156, 5
        %vm1173 = vcmp.ge.s32.totalorder %v1157, 5
        %vm1174 = vcmp.ge.s32.totalorder %v1158, 5
        %vm1175 = vcmp.ge.s32.totalorder %v1159, 5
        %v1176 = vsub.s32 %v1144, 5
        %v1177 = vsub.s32 %v1145, 5
        %v1178 = vsub.s32 %v1146, 5
        %v1179 = vsub.s32 %v1147, 5
        %v1180 = vsub.s32 %v1148, 5
        %v1181 = vsub.s32 %v1149, 5
        %v1182 = vsub.s32 %v1150, 5
        %v1183 = vsub.s32 %v1151, 5
        %v1184 = vsub.s32 %v1152, 5
        %v1185 = vsub.s32 %v1153, 5
        %v1186 = vsub.s32 %v1154, 5
        %v1187 = vsub.s32 %v1155, 5
        %v1188 = vsub.s32 %v1156, 5
        %v1189 = vsub.s32 %v1157, 5
        %v1190 = vsub.s32 %v1158, 5
        %v1191 = vsub.s32 %v1159, 5
        %v1192 = vsel %vm1160, %v1176, %v1144
        %v1193 = vsel %vm1161, %v1177, %v1145
        %v1194 = vsel %vm1162, %v1178, %v1146
        %v1195 = vsel %vm1163, %v1179, %v1147
        %v1196 = vsel %vm1164, %v1180, %v1148
        %v1197 = vsel %vm1165, %v1181, %v1149
        %v1198 = vsel %vm1166, %v1182, %v1150
        %v1199 = vsel %vm1167, %v1183, %v1151
        %v1200 = vsel %vm1168, %v1184, %v1152
        %v1201 = vsel %vm1169, %v1185, %v1153
        %v1202 = vsel %vm1170, %v1186, %v1154
        %v1203 = vsel %vm1171, %v1187, %v1155
        %v1204 = vsel %vm1172, %v1188, %v1156
        %v1205 = vsel %vm1173, %v1189, %v1157
        %v1206 = vsel %vm1174, %v1190, %v1158
        %v1207 = vsel %vm1175, %v1191, %v1159
        %v1208 = vadd.s32 %v1192, %v901
        %v1209 = vadd.s32 %v1193, %v903
        %v1210 = vadd.s32 %v1194, %v905
        %v1211 = vadd.s32 %v1195, %v907
        %v1212 = vadd.s32 %v1196, %v909
        %v1213 = vadd.s32 %v1197, %v911
        %v1214 = vadd.s32 %v1198, %v913
        %v1215 = vadd.s32 %v1199, %v915
        %v1216 = vadd.s32 %v1200, %v917
        %v1217 = vadd.s32 %v1201, %v919
        %v1218 = vadd.s32 %v1202, %v921
        %v1219 = vadd.s32 %v1203, %v923
        %v1220 = vadd.s32 %v1204, %v925
        %v1221 = vadd.s32 %v1205, %v927
        %v1222 = vadd.s32 %v1206, %v929
        %v1223 = vadd.s32 %v1207, %v931
        %1224 = vset.pattern.permute.xlu0 0
        %1225 = vperm.xlu0 %1224, %v1208
        %v1226 = vpop.permute.xlu0 %1225
        %1227 = vset.pattern.permute.xlu0 0
        %1228 = vperm.xlu0 %1227, %v1209
        %v1229 = vpop.permute.xlu0 %1228
        %1230 = vset.pattern.permute.xlu0 0
        %1231 = vperm.xlu0 %1230, %v1210
        %v1232 = vpop.permute.xlu0 %1231
        %1233 = vset.pattern.permute.xlu0 0
        %1234 = vperm.xlu0 %1233, %v1211
        %v1235 = vpop.permute.xlu0 %1234
        %1236 = vset.pattern.permute.xlu0 0
        %1237 = vperm.xlu0 %1236, %v1212
        %v1238 = vpop.permute.xlu0 %1237
        %1239 = vset.pattern.permute.xlu0 0
        %1240 = vperm.xlu0 %1239, %v1213
        %v1241 = vpop.permute.xlu0 %1240
        %1242 = vset.pattern.permute.xlu0 0
        %1243 = vperm.xlu0 %1242, %v1214
        %v1244 = vpop.permute.xlu0 %1243
        %1245 = vset.pattern.permute.xlu0 0
        %1246 = vperm.xlu0 %1245, %v1215
        %v1247 = vpop.permute.xlu0 %1246
        %1248 = vset.pattern.permute.xlu0 0
        %1249 = vperm.xlu0 %1248, %v1216
        %v1250 = vpop.permute.xlu0 %1249
        %1251 = vset.pattern.permute.xlu0 0
        %1252 = vperm.xlu0 %1251, %v1217
        %v1253 = vpop.permute.xlu0 %1252
        %1254 = vset.pattern.permute.xlu0 0
        %1255 = vperm.xlu0 %1254, %v1218
        %v1256 = vpop.permute.xlu0 %1255
        %1257 = vset.pattern.permute.xlu0 0
        %1258 = vperm.xlu0 %1257, %v1219
        %v1259 = vpop.permute.xlu0 %1258
        %1260 = vset.pattern.permute.xlu0 0
        %1261 = vperm.xlu0 %1260, %v1220
        %v1262 = vpop.permute.xlu0 %1261
        %1263 = vset.pattern.permute.xlu0 0
        %1264 = vperm.xlu0 %1263, %v1221
        %v1265 = vpop.permute.xlu0 %1264
        %1266 = vset.pattern.permute.xlu0 0
        %1267 = vperm.xlu0 %1266, %v1222
        %v1268 = vpop.permute.xlu0 %1267
        %1269 = vset.pattern.permute.xlu0 0
        %1270 = vperm.xlu0 %1269, %v1223
        %v1271 = vpop.permute.xlu0 %1270
        %vm1272 = vcmp.eq.s32.totalorder %v1226, %v999
        %vm1273 = vcmp.eq.s32.totalorder %v1229, %v999
        %vm1274 = vcmp.eq.s32.totalorder %v1232, %v999
        %vm1275 = vcmp.eq.s32.totalorder %v1235, %v999
        %vm1276 = vcmp.eq.s32.totalorder %v1238, %v999
        %vm1277 = vcmp.eq.s32.totalorder %v1241, %v999
        %vm1278 = vcmp.eq.s32.totalorder %v1244, %v999
        %vm1279 = vcmp.eq.s32.totalorder %v1247, %v999
        %vm1280 = vcmp.eq.s32.totalorder %v1250, %v999
        %vm1281 = vcmp.eq.s32.totalorder %v1253, %v999
        %vm1282 = vcmp.eq.s32.totalorder %v1256, %v999
        %vm1283 = vcmp.eq.s32.totalorder %v1259, %v999
        %vm1284 = vcmp.eq.s32.totalorder %v1262, %v999
        %vm1285 = vcmp.eq.s32.totalorder %v1265, %v999
        %vm1286 = vcmp.eq.s32.totalorder %v1268, %v999
        %vm1287 = vcmp.eq.s32.totalorder %v1271, %v999
        %1289 = vset.pattern.permute.xlu0 0
        %1290 = vperm.xlu0 %1289, %v1128
        %v1291 = vpop.permute.xlu0 %1290
        %1294 = vset.pattern.permute.xlu0 0
        %1295 = vperm.xlu0 %1294, %v1129
        %v1296 = vpop.permute.xlu0 %1295
        %1299 = vset.pattern.permute.xlu0 0
        %1300 = vperm.xlu0 %1299, %v1130
        %v1301 = vpop.permute.xlu0 %1300
        %1304 = vset.pattern.permute.xlu0 0
        %1305 = vperm.xlu0 %1304, %v1131
        %v1306 = vpop.permute.xlu0 %1305
        %1309 = vset.pattern.permute.xlu0 0
        %1310 = vperm.xlu0 %1309, %v1132
        %v1311 = vpop.permute.xlu0 %1310
        %1314 = vset.pattern.permute.xlu0 0
        %1315 = vperm.xlu0 %1314, %v1133
        %v1316 = vpop.permute.xlu0 %1315
        %1319 = vset.pattern.permute.xlu0 0
        %1320 = vperm.xlu0 %1319, %v1134
        %v1321 = vpop.permute.xlu0 %1320
        %1324 = vset.pattern.permute.xlu0 0
        %1325 = vperm.xlu0 %1324, %v1135
        %v1326 = vpop.permute.xlu0 %1325
        %1329 = vset.pattern.permute.xlu0 0
        %1330 = vperm.xlu0 %1329, %v1136
        %v1331 = vpop.permute.xlu0 %1330
        %1334 = vset.pattern.permute.xlu0 0
        %1335 = vperm.xlu0 %1334, %v1137
        %v1336 = vpop.permute.xlu0 %1335
        %1339 = vset.pattern.permute.xlu0 0
        %1340 = vperm.xlu0 %1339, %v1138
        %v1341 = vpop.permute.xlu0 %1340
        %1344 = vset.pattern.permute.xlu0 0
        %1345 = vperm.xlu0 %1344, %v1139
        %v1346 = vpop.permute.xlu0 %1345
        %1349 = vset.pattern.permute.xlu0 0
        %1350 = vperm.xlu0 %1349, %v1140
        %v1351 = vpop.permute.xlu0 %1350
        %1354 = vset.pattern.permute.xlu0 0
        %1355 = vperm.xlu0 %1354, %v1141
        %v1356 = vpop.permute.xlu0 %1355
        %1359 = vset.pattern.permute.xlu0 0
        %1360 = vperm.xlu0 %1359, %v1142
        %v1361 = vpop.permute.xlu0 %1360
        %1364 = vset.pattern.permute.xlu0 0
        %1365 = vperm.xlu0 %1364, %v1143
        %v1366 = vpop.permute.xlu0 %1365
        %v1368 = vsel %vm1272, %v1291, 0.0
        %v1369 = vsel %vm1273, %v1296, 0.0
        %v1370 = vsel %vm1274, %v1301, 0.0
        %v1371 = vsel %vm1275, %v1306, 0.0
        %v1372 = vsel %vm1276, %v1311, 0.0
        %v1373 = vsel %vm1277, %v1316, 0.0
        %v1374 = vsel %vm1278, %v1321, 0.0
        %v1375 = vsel %vm1279, %v1326, 0.0
        %v1376 = vsel %vm1280, %v1331, 0.0
        %v1377 = vsel %vm1281, %v1336, 0.0
        %v1378 = vsel %vm1282, %v1341, 0.0
        %v1379 = vsel %vm1283, %v1346, 0.0
        %v1380 = vsel %vm1284, %v1351, 0.0
        %v1381 = vsel %vm1285, %v1356, 0.0
        %v1382 = vsel %vm1286, %v1361, 0.0
        %v1383 = vsel %vm1287, %v1366, 0.0
        %v1384 = vadd.f32 %v1112, %v1368
        %v1385 = vadd.f32 %v1113, %v1369
        %v1386 = vadd.f32 %v1114, %v1370
        %v1387 = vadd.f32 %v1115, %v1371
        %v1388 = vadd.f32 %v1116, %v1372
        %v1389 = vadd.f32 %v1117, %v1373
        %v1390 = vadd.f32 %v1118, %v1374
        %v1391 = vadd.f32 %v1119, %v1375
        %v1392 = vadd.f32 %v1120, %v1376
        %v1393 = vadd.f32 %v1121, %v1377
        %v1394 = vadd.f32 %v1122, %v1378
        %v1395 = vadd.f32 %v1123, %v1379
        %v1396 = vadd.f32 %v1124, %v1380
        %v1397 = vadd.f32 %v1125, %v1381
        %v1398 = vadd.f32 %v1126, %v1382
        %v1399 = vadd.f32 %v1127, %v1383
        %1416 = vrot.lane.b32.xlu0 %v707, 127
        %v1417 = vpop.permute.xlu0 %1416
        %1418 = vrot.lane.b32.xlu0 %v708, 127
        %v1419 = vpop.permute.xlu0 %1418
        %1420 = vrot.lane.b32.xlu0 %v709, 127
        %v1421 = vpop.permute.xlu0 %1420
        %1422 = vrot.lane.b32.xlu0 %v710, 127
        %v1423 = vpop.permute.xlu0 %1422
        %1424 = vrot.lane.b32.xlu0 %v711, 127
        %v1425 = vpop.permute.xlu0 %1424
        %1426 = vrot.lane.b32.xlu0 %v712, 127
        %v1427 = vpop.permute.xlu0 %1426
        %1428 = vrot.lane.b32.xlu0 %v713, 127
        %v1429 = vpop.permute.xlu0 %1428
        %1430 = vrot.lane.b32.xlu0 %v714, 127
        %v1431 = vpop.permute.xlu0 %1430
        %1432 = vrot.lane.b32.xlu0 %v715, 127
        %v1433 = vpop.permute.xlu0 %1432
        %1434 = vrot.lane.b32.xlu0 %v716, 127
        %v1435 = vpop.permute.xlu0 %1434
        %1436 = vrot.lane.b32.xlu0 %v717, 127
        %v1437 = vpop.permute.xlu0 %1436
        %1438 = vrot.lane.b32.xlu0 %v718, 127
        %v1439 = vpop.permute.xlu0 %1438
        %1440 = vrot.lane.b32.xlu0 %v719, 127
        %v1441 = vpop.permute.xlu0 %1440
        %1442 = vrot.lane.b32.xlu0 %v720, 127
        %v1443 = vpop.permute.xlu0 %1442
        %1444 = vrot.lane.b32.xlu0 %v721, 127
        %v1445 = vpop.permute.xlu0 %1444
        %1446 = vrot.lane.b32.xlu0 %v722, 127
        %v1447 = vpop.permute.xlu0 %1446
        %v1464 = vmul.f32 %v740, %v1417
        %v1465 = vmul.f32 %v741, %v1419
        %v1466 = vmul.f32 %v742, %v1421
        %v1467 = vmul.f32 %v743, %v1423
        %v1468 = vmul.f32 %v744, %v1425
        %v1469 = vmul.f32 %v745, %v1427
        %v1470 = vmul.f32 %v746, %v1429
        %v1471 = vmul.f32 %v747, %v1431
        %v1472 = vmul.f32 %v748, %v1433
        %v1473 = vmul.f32 %v749, %v1435
        %v1474 = vmul.f32 %v750, %v1437
        %v1475 = vmul.f32 %v751, %v1439
        %v1476 = vmul.f32 %v752, %v1441
        %v1477 = vmul.f32 %v753, %v1443
        %v1478 = vmul.f32 %v754, %v1445
        %v1479 = vmul.f32 %v755, %v1447
        %v1480 = vmul.u32 %v1192, 5
        %v1481 = vmul.u32 %v1193, 5
        %v1482 = vmul.u32 %v1194, 5
        %v1483 = vmul.u32 %v1195, 5
        %v1484 = vmul.u32 %v1196, 5
        %v1485 = vmul.u32 %v1197, 5
        %v1486 = vmul.u32 %v1198, 5
        %v1487 = vmul.u32 %v1199, 5
        %v1488 = vmul.u32 %v1200, 5
        %v1489 = vmul.u32 %v1201, 5
        %v1490 = vmul.u32 %v1202, 5
        %v1491 = vmul.u32 %v1203, 5
        %v1492 = vmul.u32 %v1204, 5
        %v1493 = vmul.u32 %v1205, 5
        %v1494 = vmul.u32 %v1206, 5
        %v1495 = vmul.u32 %v1207, 5
        %1496 = vrot.lane.b32.xlu0 %v1480, 127
        %v1497 = vpop.permute.xlu0 %1496
        %1498 = vrot.lane.b32.xlu0 %v1481, 127
        %v1499 = vpop.permute.xlu0 %1498
        %1500 = vrot.lane.b32.xlu0 %v1482, 127
        %v1501 = vpop.permute.xlu0 %1500
        %1502 = vrot.lane.b32.xlu0 %v1483, 127
        %v1503 = vpop.permute.xlu0 %1502
        %1504 = vrot.lane.b32.xlu0 %v1484, 127
        %v1505 = vpop.permute.xlu0 %1504
        %1506 = vrot.lane.b32.xlu0 %v1485, 127
        %v1507 = vpop.permute.xlu0 %1506
        %1508 = vrot.lane.b32.xlu0 %v1486, 127
        %v1509 = vpop.permute.xlu0 %1508
        %1510 = vrot.lane.b32.xlu0 %v1487, 127
        %v1511 = vpop.permute.xlu0 %1510
        %1512 = vrot.lane.b32.xlu0 %v1488, 127
        %v1513 = vpop.permute.xlu0 %1512
        %1514 = vrot.lane.b32.xlu0 %v1489, 127
        %v1515 = vpop.permute.xlu0 %1514
        %1516 = vrot.lane.b32.xlu0 %v1490, 127
        %v1517 = vpop.permute.xlu0 %1516
        %1518 = vrot.lane.b32.xlu0 %v1491, 127
        %v1519 = vpop.permute.xlu0 %1518
        %1520 = vrot.lane.b32.xlu0 %v1492, 127
        %v1521 = vpop.permute.xlu0 %1520
        %1522 = vrot.lane.b32.xlu0 %v1493, 127
        %v1523 = vpop.permute.xlu0 %1522
        %1524 = vrot.lane.b32.xlu0 %v1494, 127
        %v1525 = vpop.permute.xlu0 %1524
        %1526 = vrot.lane.b32.xlu0 %v1495, 127
        %v1527 = vpop.permute.xlu0 %1526
        %v1528 = vadd.s32 %v868, %v1497
        %v1529 = vadd.s32 %v869, %v1499
        %v1530 = vadd.s32 %v870, %v1501
        %v1531 = vadd.s32 %v871, %v1503
        %v1532 = vadd.s32 %v872, %v1505
        %v1533 = vadd.s32 %v873, %v1507
        %v1534 = vadd.s32 %v874, %v1509
        %v1535 = vadd.s32 %v875, %v1511
        %v1536 = vadd.s32 %v876, %v1513
        %v1537 = vadd.s32 %v877, %v1515
        %v1538 = vadd.s32 %v878, %v1517
        %v1539 = vadd.s32 %v879, %v1519
        %v1540 = vadd.s32 %v880, %v1521
        %v1541 = vadd.s32 %v881, %v1523
        %v1542 = vadd.s32 %v882, %v1525
        %v1543 = vadd.s32 %v883, %v1527
        %1544 = vset.pattern.permute.xlu0 0
        %1545 = vperm.xlu0 %1544, %v1528
        %v1546 = vpop.permute.xlu0 %1545
        %1547 = vset.pattern.permute.xlu0 0
        %1548 = vperm.xlu0 %1547, %v1529
        %v1549 = vpop.permute.xlu0 %1548
        %1550 = vset.pattern.permute.xlu0 0
        %1551 = vperm.xlu0 %1550, %v1530
        %v1552 = vpop.permute.xlu0 %1551
        %1553 = vset.pattern.permute.xlu0 0
        %1554 = vperm.xlu0 %1553, %v1531
        %v1555 = vpop.permute.xlu0 %1554
        %1556 = vset.pattern.permute.xlu0 0
        %1557 = vperm.xlu0 %1556, %v1532
        %v1558 = vpop.permute.xlu0 %1557
        %1559 = vset.pattern.permute.xlu0 0
        %1560 = vperm.xlu0 %1559, %v1533
        %v1561 = vpop.permute.xlu0 %1560
        %1562 = vset.pattern.permute.xlu0 0
        %1563 = vperm.xlu0 %1562, %v1534
        %v1564 = vpop.permute.xlu0 %1563
        %1565 = vset.pattern.permute.xlu0 0
        %1566 = vperm.xlu0 %1565, %v1535
        %v1567 = vpop.permute.xlu0 %1566
        %1568 = vset.pattern.permute.xlu0 0
        %1569 = vperm.xlu0 %1568, %v1536
        %v1570 = vpop.permute.xlu0 %1569
        %1571 = vset.pattern.permute.xlu0 0
        %1572 = vperm.xlu0 %1571, %v1537
        %v1573 = vpop.permute.xlu0 %1572
        %1574 = vset.pattern.permute.xlu0 0
        %1575 = vperm.xlu0 %1574, %v1538
        %v1576 = vpop.permute.xlu0 %1575
        %1577 = vset.pattern.permute.xlu0 0
        %1578 = vperm.xlu0 %1577, %v1539
        %v1579 = vpop.permute.xlu0 %1578
        %1580 = vset.pattern.permute.xlu0 0
        %1581 = vperm.xlu0 %1580, %v1540
        %v1582 = vpop.permute.xlu0 %1581
        %1583 = vset.pattern.permute.xlu0 0
        %1584 = vperm.xlu0 %1583, %v1541
        %v1585 = vpop.permute.xlu0 %1584
        %1586 = vset.pattern.permute.xlu0 0
        %1587 = vperm.xlu0 %1586, %v1542
        %v1588 = vpop.permute.xlu0 %1587
        %1589 = vset.pattern.permute.xlu0 0
        %1590 = vperm.xlu0 %1589, %v1543
        %v1591 = vpop.permute.xlu0 %1590
        %vm1592 = vcmp.eq.s32.totalorder %v1546, %v999
        %vm1593 = vcmp.eq.s32.totalorder %v1549, %v999
        %vm1594 = vcmp.eq.s32.totalorder %v1552, %v999
        %vm1595 = vcmp.eq.s32.totalorder %v1555, %v999
        %vm1596 = vcmp.eq.s32.totalorder %v1558, %v999
        %vm1597 = vcmp.eq.s32.totalorder %v1561, %v999
        %vm1598 = vcmp.eq.s32.totalorder %v1564, %v999
        %vm1599 = vcmp.eq.s32.totalorder %v1567, %v999
        %vm1600 = vcmp.eq.s32.totalorder %v1570, %v999
        %vm1601 = vcmp.eq.s32.totalorder %v1573, %v999
        %vm1602 = vcmp.eq.s32.totalorder %v1576, %v999
        %vm1603 = vcmp.eq.s32.totalorder %v1579, %v999
        %vm1604 = vcmp.eq.s32.totalorder %v1582, %v999
        %vm1605 = vcmp.eq.s32.totalorder %v1585, %v999
        %vm1606 = vcmp.eq.s32.totalorder %v1588, %v999
        %vm1607 = vcmp.eq.s32.totalorder %v1591, %v999
        %1609 = vset.pattern.permute.xlu0 0
        %1610 = vperm.xlu0 %1609, %v1464
        %v1611 = vpop.permute.xlu0 %1610
        %1614 = vset.pattern.permute.xlu0 0
        %1615 = vperm.xlu0 %1614, %v1465
        %v1616 = vpop.permute.xlu0 %1615
        %1619 = vset.pattern.permute.xlu0 0
        %1620 = vperm.xlu0 %1619, %v1466
        %v1621 = vpop.permute.xlu0 %1620
        %1624 = vset.pattern.permute.xlu0 0
        %1625 = vperm.xlu0 %1624, %v1467
        %v1626 = vpop.permute.xlu0 %1625
        %1629 = vset.pattern.permute.xlu0 0
        %1630 = vperm.xlu0 %1629, %v1468
        %v1631 = vpop.permute.xlu0 %1630
        %1634 = vset.pattern.permute.xlu0 0
        %1635 = vperm.xlu0 %1634, %v1469
        %v1636 = vpop.permute.xlu0 %1635
        %1639 = vset.pattern.permute.xlu0 0
        %1640 = vperm.xlu0 %1639, %v1470
        %v1641 = vpop.permute.xlu0 %1640
        %1644 = vset.pattern.permute.xlu0 0
        %1645 = vperm.xlu0 %1644, %v1471
        %v1646 = vpop.permute.xlu0 %1645
        %1649 = vset.pattern.permute.xlu0 0
        %1650 = vperm.xlu0 %1649, %v1472
        %v1651 = vpop.permute.xlu0 %1650
        %1654 = vset.pattern.permute.xlu0 0
        %1655 = vperm.xlu0 %1654, %v1473
        %v1656 = vpop.permute.xlu0 %1655
        %1659 = vset.pattern.permute.xlu0 0
        %1660 = vperm.xlu0 %1659, %v1474
        %v1661 = vpop.permute.xlu0 %1660
        %1664 = vset.pattern.permute.xlu0 0
        %1665 = vperm.xlu0 %1664, %v1475
        %v1666 = vpop.permute.xlu0 %1665
        %1669 = vset.pattern.permute.xlu0 0
        %1670 = vperm.xlu0 %1669, %v1476
        %v1671 = vpop.permute.xlu0 %1670
        %1674 = vset.pattern.permute.xlu0 0
        %1675 = vperm.xlu0 %1674, %v1477
        %v1676 = vpop.permute.xlu0 %1675
        %1679 = vset.pattern.permute.xlu0 0
        %1680 = vperm.xlu0 %1679, %v1478
        %v1681 = vpop.permute.xlu0 %1680
        %1684 = vset.pattern.permute.xlu0 0
        %1685 = vperm.xlu0 %1684, %v1479
        %v1686 = vpop.permute.xlu0 %1685
        %v1688 = vsel %vm1592, %v1611, 0.0
        %v1689 = vsel %vm1593, %v1616, 0.0
        %v1690 = vsel %vm1594, %v1621, 0.0
        %v1691 = vsel %vm1595, %v1626, 0.0
        %v1692 = vsel %vm1596, %v1631, 0.0
        %v1693 = vsel %vm1597, %v1636, 0.0
        %v1694 = vsel %vm1598, %v1641, 0.0
        %v1695 = vsel %vm1599, %v1646, 0.0
        %v1696 = vsel %vm1600, %v1651, 0.0
        %v1697 = vsel %vm1601, %v1656, 0.0
        %v1698 = vsel %vm1602, %v1661, 0.0
        %v1699 = vsel %vm1603, %v1666, 0.0
        %v1700 = vsel %vm1604, %v1671, 0.0
        %v1701 = vsel %vm1605, %v1676, 0.0
        %v1702 = vsel %vm1606, %v1681, 0.0
        %v1703 = vsel %vm1607, %v1686, 0.0
        %v1704 = vadd.f32 %v1384, %v1688
        %v1705 = vadd.f32 %v1385, %v1689
        %v1706 = vadd.f32 %v1386, %v1690
        %v1707 = vadd.f32 %v1387, %v1691
        %v1708 = vadd.f32 %v1388, %v1692
        %v1709 = vadd.f32 %v1389, %v1693
        %v1710 = vadd.f32 %v1390, %v1694
        %v1711 = vadd.f32 %v1391, %v1695
        %v1712 = vadd.f32 %v1392, %v1696
        %v1713 = vadd.f32 %v1393, %v1697
        %v1714 = vadd.f32 %v1394, %v1698
        %v1715 = vadd.f32 %v1395, %v1699
        %v1716 = vadd.f32 %v1396, %v1700
        %v1717 = vadd.f32 %v1397, %v1701
        %v1718 = vadd.f32 %v1398, %v1702
        %v1719 = vadd.f32 %v1399, %v1703
        %v1720 = vmul.f32 %v707, %v1417
        %v1721 = vmul.f32 %v708, %v1419
        %v1722 = vmul.f32 %v709, %v1421
        %v1723 = vmul.f32 %v710, %v1423
        %v1724 = vmul.f32 %v711, %v1425
        %v1725 = vmul.f32 %v712, %v1427
        %v1726 = vmul.f32 %v713, %v1429
        %v1727 = vmul.f32 %v714, %v1431
        %v1728 = vmul.f32 %v715, %v1433
        %v1729 = vmul.f32 %v716, %v1435
        %v1730 = vmul.f32 %v717, %v1437
        %v1731 = vmul.f32 %v718, %v1439
        %v1732 = vmul.f32 %v719, %v1441
        %v1733 = vmul.f32 %v720, %v1443
        %v1734 = vmul.f32 %v721, %v1445
        %v1735 = vmul.f32 %v722, %v1447
        %v1736 = vadd.s32 %v1192, %v1497
        %v1737 = vadd.s32 %v1193, %v1499
        %v1738 = vadd.s32 %v1194, %v1501
        %v1739 = vadd.s32 %v1195, %v1503
        %v1740 = vadd.s32 %v1196, %v1505
        %v1741 = vadd.s32 %v1197, %v1507
        %v1742 = vadd.s32 %v1198, %v1509
        %v1743 = vadd.s32 %v1199, %v1511
        %v1744 = vadd.s32 %v1200, %v1513
        %v1745 = vadd.s32 %v1201, %v1515
        %v1746 = vadd.s32 %v1202, %v1517
        %v1747 = vadd.s32 %v1203, %v1519
        %v1748 = vadd.s32 %v1204, %v1521
        %v1749 = vadd.s32 %v1205, %v1523
        %v1750 = vadd.s32 %v1206, %v1525
        %v1751 = vadd.s32 %v1207, %v1527
        %1752 = vset.pattern.permute.xlu0 0
        %1753 = vperm.xlu0 %1752, %v1736
        %v1754 = vpop.permute.xlu0 %1753
        %1755 = vset.pattern.permute.xlu0 0
        %1756 = vperm.xlu0 %1755, %v1737
        %v1757 = vpop.permute.xlu0 %1756
        %1758 = vset.pattern.permute.xlu0 0
        %1759 = vperm.xlu0 %1758, %v1738
        %v1760 = vpop.permute.xlu0 %1759
        %1761 = vset.pattern.permute.xlu0 0
        %1762 = vperm.xlu0 %1761, %v1739
        %v1763 = vpop.permute.xlu0 %1762
        %1764 = vset.pattern.permute.xlu0 0
        %1765 = vperm.xlu0 %1764, %v1740
        %v1766 = vpop.permute.xlu0 %1765
        %1767 = vset.pattern.permute.xlu0 0
        %1768 = vperm.xlu0 %1767, %v1741
        %v1769 = vpop.permute.xlu0 %1768
        %1770 = vset.pattern.permute.xlu0 0
        %1771 = vperm.xlu0 %1770, %v1742
        %v1772 = vpop.permute.xlu0 %1771
        %1773 = vset.pattern.permute.xlu0 0
        %1774 = vperm.xlu0 %1773, %v1743
        %v1775 = vpop.permute.xlu0 %1774
        %1776 = vset.pattern.permute.xlu0 0
        %1777 = vperm.xlu0 %1776, %v1744
        %v1778 = vpop.permute.xlu0 %1777
        %1779 = vset.pattern.permute.xlu0 0
        %1780 = vperm.xlu0 %1779, %v1745
        %v1781 = vpop.permute.xlu0 %1780
        %1782 = vset.pattern.permute.xlu0 0
        %1783 = vperm.xlu0 %1782, %v1746
        %v1784 = vpop.permute.xlu0 %1783
        %1785 = vset.pattern.permute.xlu0 0
        %1786 = vperm.xlu0 %1785, %v1747
        %v1787 = vpop.permute.xlu0 %1786
        %1788 = vset.pattern.permute.xlu0 0
        %1789 = vperm.xlu0 %1788, %v1748
        %v1790 = vpop.permute.xlu0 %1789
        %1791 = vset.pattern.permute.xlu0 0
        %1792 = vperm.xlu0 %1791, %v1749
        %v1793 = vpop.permute.xlu0 %1792
        %1794 = vset.pattern.permute.xlu0 0
        %1795 = vperm.xlu0 %1794, %v1750
        %v1796 = vpop.permute.xlu0 %1795
        %1797 = vset.pattern.permute.xlu0 0
        %1798 = vperm.xlu0 %1797, %v1751
        %v1799 = vpop.permute.xlu0 %1798
        %vm1800 = vcmp.eq.s32.totalorder %v1754, %v999
        %vm1801 = vcmp.eq.s32.totalorder %v1757, %v999
        %vm1802 = vcmp.eq.s32.totalorder %v1760, %v999
        %vm1803 = vcmp.eq.s32.totalorder %v1763, %v999
        %vm1804 = vcmp.eq.s32.totalorder %v1766, %v999
        %vm1805 = vcmp.eq.s32.totalorder %v1769, %v999
        %vm1806 = vcmp.eq.s32.totalorder %v1772, %v999
        %vm1807 = vcmp.eq.s32.totalorder %v1775, %v999
        %vm1808 = vcmp.eq.s32.totalorder %v1778, %v999
        %vm1809 = vcmp.eq.s32.totalorder %v1781, %v999
        %vm1810 = vcmp.eq.s32.totalorder %v1784, %v999
        %vm1811 = vcmp.eq.s32.totalorder %v1787, %v999
        %vm1812 = vcmp.eq.s32.totalorder %v1790, %v999
        %vm1813 = vcmp.eq.s32.totalorder %v1793, %v999
        %vm1814 = vcmp.eq.s32.totalorder %v1796, %v999
        %vm1815 = vcmp.eq.s32.totalorder %v1799, %v999
        %1817 = vset.pattern.permute.xlu0 0
        %1818 = vperm.xlu0 %1817, %v1720
        %v1819 = vpop.permute.xlu0 %1818
        %1822 = vset.pattern.permute.xlu0 0
        %1823 = vperm.xlu0 %1822, %v1721
        %v1824 = vpop.permute.xlu0 %1823
        %1827 = vset.pattern.permute.xlu0 0
        %1828 = vperm.xlu0 %1827, %v1722
        %v1829 = vpop.permute.xlu0 %1828
        %1832 = vset.pattern.permute.xlu0 0
        %1833 = vperm.xlu0 %1832, %v1723
        %v1834 = vpop.permute.xlu0 %1833
        %1837 = vset.pattern.permute.xlu0 0
        %1838 = vperm.xlu0 %1837, %v1724
        %v1839 = vpop.permute.xlu0 %1838
        %1842 = vset.pattern.permute.xlu0 0
        %1843 = vperm.xlu0 %1842, %v1725
        %v1844 = vpop.permute.xlu0 %1843
        %1847 = vset.pattern.permute.xlu0 0
        %1848 = vperm.xlu0 %1847, %v1726
        %v1849 = vpop.permute.xlu0 %1848
        %1852 = vset.pattern.permute.xlu0 0
        %1853 = vperm.xlu0 %1852, %v1727
        %v1854 = vpop.permute.xlu0 %1853
        %1857 = vset.pattern.permute.xlu0 0
        %1858 = vperm.xlu0 %1857, %v1728
        %v1859 = vpop.permute.xlu0 %1858
        %1862 = vset.pattern.permute.xlu0 0
        %1863 = vperm.xlu0 %1862, %v1729
        %v1864 = vpop.permute.xlu0 %1863
        %1867 = vset.pattern.permute.xlu0 0
        %1868 = vperm.xlu0 %1867, %v1730
        %v1869 = vpop.permute.xlu0 %1868
        %1872 = vset.pattern.permute.xlu0 0
        %1873 = vperm.xlu0 %1872, %v1731
        %v1874 = vpop.permute.xlu0 %1873
        %1877 = vset.pattern.permute.xlu0 0
        %1878 = vperm.xlu0 %1877, %v1732
        %v1879 = vpop.permute.xlu0 %1878
        %1882 = vset.pattern.permute.xlu0 0
        %1883 = vperm.xlu0 %1882, %v1733
        %v1884 = vpop.permute.xlu0 %1883
        %1887 = vset.pattern.permute.xlu0 0
        %1888 = vperm.xlu0 %1887, %v1734
        %v1889 = vpop.permute.xlu0 %1888
        %1892 = vset.pattern.permute.xlu0 0
        %1893 = vperm.xlu0 %1892, %v1735
        %v1894 = vpop.permute.xlu0 %1893
        %v1896 = vsel %vm1800, %v1819, 0.0
        %v1897 = vsel %vm1801, %v1824, 0.0
        %v1898 = vsel %vm1802, %v1829, 0.0
        %v1899 = vsel %vm1803, %v1834, 0.0
        %v1900 = vsel %vm1804, %v1839, 0.0
        %v1901 = vsel %vm1805, %v1844, 0.0
        %v1902 = vsel %vm1806, %v1849, 0.0
        %v1903 = vsel %vm1807, %v1854, 0.0
        %v1904 = vsel %vm1808, %v1859, 0.0
        %v1905 = vsel %vm1809, %v1864, 0.0
        %v1906 = vsel %vm1810, %v1869, 0.0
        %v1907 = vsel %vm1811, %v1874, 0.0
        %v1908 = vsel %vm1812, %v1879, 0.0
        %v1909 = vsel %vm1813, %v1884, 0.0
        %v1910 = vsel %vm1814, %v1889, 0.0
        %v1911 = vsel %vm1815, %v1894, 0.0
        %v1912 = vadd.f32 %v1704, %v1896
        %v1913 = vadd.f32 %v1705, %v1897
        %v1914 = vadd.f32 %v1706, %v1898
        %v1915 = vadd.f32 %v1707, %v1899
        %v1916 = vadd.f32 %v1708, %v1900
        %v1917 = vadd.f32 %v1709, %v1901
        %v1918 = vadd.f32 %v1710, %v1902
        %v1919 = vadd.f32 %v1711, %v1903
        %v1920 = vadd.f32 %v1712, %v1904
        %v1921 = vadd.f32 %v1713, %v1905
        %v1922 = vadd.f32 %v1714, %v1906
        %v1923 = vadd.f32 %v1715, %v1907
        %v1924 = vadd.f32 %v1716, %v1908
        %v1925 = vadd.f32 %v1717, %v1909
        %v1926 = vadd.f32 %v1718, %v1910
        %v1927 = vadd.f32 %v1719, %v1911
        %v1928 = vld [vmem:[%s4] sm:$0x7]
        %vm1929 = vcmask 23552
        %v1931 = vsel %vm1929, %v597, 0
        %v1934 = vsel %vm1929, %v602, 0
        %v1937 = vsel %vm1929, %v607, 0
        %v1940 = vsel %vm1929, %v612, 0
        %v1943 = vsel %vm1929, %v617, 0
        %v1946 = vsel %vm1929, %v622, 0
        %v1949 = vsel %vm1929, %v627, 0
        %v1952 = vsel %vm1929, %v632, 0
        %v1955 = vsel %vm1929, %v637, 0
        %v1958 = vsel %vm1929, %v642, 0
        %v1961 = vsel %vm1929, %v647, 0
        %v1964 = vsel %vm1929, %v652, 0
        %v1967 = vsel %vm1929, %v657, 0
        %v1970 = vsel %vm1929, %v662, 0
        %v1973 = vsel %vm1929, %v667, 0
        %v1976 = vsel %vm1929, %v672, 0
        %vm1978 = vcmask 1042432
        %v1980 = vsel %vm1978, %v1928, 0
        %1982 = vmatprep.subr.mxu0 0.0
        %1983 = vmatpush1.msra.mxu0 %v1980
        %1984 = vmatprep.subr.mxu0 0.0
        %1985 = vmatpush1.msra.mxu0 0.0
        %1986 = vmatprep.subr.mxu0 0.0
        %1987 = vmatpush1.msra.mxu0 0.0
        %1988 = vmatprep.subr.mxu0 0.0
        %1989 = vmatpush1.msra.mxu0 0.0
        %1990 = vmatprep.subr.mxu0 0.0
        %1991 = vmatpush1.msra.mxu0 0.0
        %1992 = vmatprep.subr.mxu0 0.0
        %1993 = vmatpush1.msra.mxu0 0.0
        %1994 = vmatprep.subr.mxu0 0.0
        %1995 = vmatpush1.msra.mxu0 0.0
        %1996 = vmatprep.subr.mxu0 0.0
        %1997 = vmatpush1.msra.mxu0 0.0
        %1998 = vmatprep.subr.mxu0 0.0
        %1999 = vmatpush1.msra.mxu0 0.0
        %2000 = vmatprep.subr.mxu0 0.0
        %2001 = vmatpush1.msra.mxu0 0.0
        %2002 = vmatprep.subr.mxu0 0.0
        %2003 = vmatpush1.msra.mxu0 0.0
        %2004 = vmatprep.subr.mxu0 0.0
        %2005 = vmatpush1.msra.mxu0 0.0
        %2006 = vmatprep.subr.mxu0 0.0
        %2007 = vmatpush1.msra.mxu0 0.0
        %2008 = vmatprep.subr.mxu0 0.0
        %2009 = vmatpush1.msra.mxu0 0.0
        %2010 = vmatprep.subr.mxu0 0.0
        %2011 = vmatpush1.msra.mxu0 0.0
        %2012 = vmatprep.subr.mxu0 0.0
        %2013 = vmatpush1.msra.mxu0 0.0
        %2014 = vmatprep.subr.mxu0 0.0
        %2015 = vmatpush1.msra.mxu0 0.0
        %2016 = vmatprep.subr.mxu0 0.0
        %2017 = vmatpush1.msra.mxu0 0.0
        %2018 = vmatprep.subr.mxu0 0.0
        %2019 = vmatpush1.msra.mxu0 0.0
        %2020 = vmatprep.subr.mxu0 0.0
        %2021 = vmatpush1.msra.mxu0 0.0
        %2022 = vmatprep.subr.mxu0 0.0
        %2023 = vmatpush1.msra.mxu0 0.0
        %2024 = vmatprep.subr.mxu0 0.0
        %2025 = vmatpush1.msra.mxu0 0.0
        %2026 = vmatprep.subr.mxu0 0.0
        %2027 = vmatpush1.msra.mxu0 0.0
        %2028 = vmatprep.subr.mxu0 0.0
        %2029 = vmatpush1.msra.mxu0 0.0
        %2030 = vmatprep.subr.mxu0 0.0
        %2031 = vmatpush1.msra.mxu0 0.0
        %2032 = vmatprep.subr.mxu0 0.0
        %2033 = vmatpush1.msra.mxu0 0.0
        %2034 = vmatprep.subr.mxu0 0.0
        %2035 = vmatpush1.msra.mxu0 0.0
        %2036 = vmatprep.subr.mxu0 0.0
        %2037 = vmatpush1.msra.mxu0 0.0
        %2038 = vmatprep.subr.mxu0 0.0
        %2039 = vmatpush1.msra.mxu0 0.0
        %2040 = vmatprep.subr.mxu0 0.0
        %2041 = vmatpush1.msra.mxu0 0.0
        %2042 = vmatprep.subr.mxu0 0.0
        %2043 = vmatpush1.msra.mxu0 0.0
        %2044 = vmatprep.subr.mxu0 0.0
        %2045 = vmatpush1.msra.mxu0 0.0
        %2046 = vmatprep.mubr.f32.mxu0 0.0
        %2047 = vmatmul.mubr.f32.gmra.mrb[0].mxu0 %v1931
        %v2048 = vpop.f32.mrb[0].mxu0
        %v2049 = vadd.f32 0.0, %v2048
        %v2050 = vpop.f32.mrb[0].mxu0
        %2051 = vmatprep.mubr.f32.mxu0 0.0
        %2052 = vmatmul.mubr.f32.gmra.mrb[0].mxu0 %v1934
        %v2053 = vpop.f32.mrb[0].mxu0
        %v2054 = vadd.f32 0.0, %v2053
        %v2055 = vpop.f32.mrb[0].mxu0
        %2056 = vmatprep.mubr.f32.mxu0 0.0
        %2057 = vmatmul.mubr.f32.gmra.mrb[0].mxu0 %v1937
        %v2058 = vpop.f32.mrb[0].mxu0
        %v2059 = vadd.f32 0.0, %v2058
        %v2060 = vpop.f32.mrb[0].mxu0
        %2061 = vmatprep.mubr.f32.mxu0 0.0
        %2062 = vmatmul.mubr.f32.gmra.mrb[0].mxu0 %v1940
        %v2063 = vpop.f32.mrb[0].mxu0
        %v2064 = vadd.f32 0.0, %v2063
        %v2065 = vpop.f32.mrb[0].mxu0
        %2066 = vmatprep.mubr.f32.mxu0 0.0
        %2067 = vmatmul.mubr.f32.gmra.mrb[0].mxu0 %v1943
        %v2068 = vpop.f32.mrb[0].mxu0
        %v2069 = vadd.f32 0.0, %v2068
        %v2070 = vpop.f32.mrb[0].mxu0
        %2071 = vmatprep.mubr.f32.mxu0 0.0
        %2072 = vmatmul.mubr.f32.gmra.mrb[0].mxu0 %v1946
        %v2073 = vpop.f32.mrb[0].mxu0
        %v2074 = vadd.f32 0.0, %v2073
        %v2075 = vpop.f32.mrb[0].mxu0
        %2076 = vmatprep.mubr.f32.mxu0 0.0
        %2077 = vmatmul.mubr.f32.gmra.mrb[0].mxu0 %v1949
        %v2078 = vpop.f32.mrb[0].mxu0
        %v2079 = vadd.f32 0.0, %v2078
        %v2080 = vpop.f32.mrb[0].mxu0
        %2081 = vmatprep.mubr.f32.mxu0 0.0
        %2082 = vmatmul.mubr.f32.gmra.mrb[0].mxu0 %v1952
        %v2083 = vpop.f32.mrb[0].mxu0
        %v2084 = vadd.f32 0.0, %v2083
        %v2085 = vpop.f32.mrb[0].mxu0
        %2086 = vmatprep.mubr.f32.mxu0 0.0
        %2087 = vmatmul.mubr.f32.gmra.mrb[0].mxu0 %v1955
        %v2088 = vpop.f32.mrb[0].mxu0
        %v2089 = vadd.f32 0.0, %v2088
        %v2090 = vpop.f32.mrb[0].mxu0
        %2091 = vmatprep.mubr.f32.mxu0 0.0
        %2092 = vmatmul.mubr.f32.gmra.mrb[0].mxu0 %v1958
        %v2093 = vpop.f32.mrb[0].mxu0
        %v2094 = vadd.f32 0.0, %v2093
        %v2095 = vpop.f32.mrb[0].mxu0
        %2096 = vmatprep.mubr.f32.mxu0 0.0
        %2097 = vmatmul.mubr.f32.gmra.mrb[0].mxu0 %v1961
        %v2098 = vpop.f32.mrb[0].mxu0
        %v2099 = vadd.f32 0.0, %v2098
        %v2100 = vpop.f32.mrb[0].mxu0
        %2101 = vmatprep.mubr.f32.mxu0 0.0
        %2102 = vmatmul.mubr.f32.gmra.mrb[0].mxu0 %v1964
        %v2103 = vpop.f32.mrb[0].mxu0
        %v2104 = vadd.f32 0.0, %v2103
        %v2105 = vpop.f32.mrb[0].mxu0
        %2106 = vmatprep.mubr.f32.mxu0 0.0
        %2107 = vmatmul.mubr.f32.gmra.mrb[0].mxu0 %v1967
        %v2108 = vpop.f32.mrb[0].mxu0
        %v2109 = vadd.f32 0.0, %v2108
        %v2110 = vpop.f32.mrb[0].mxu0
        %2111 = vmatprep.mubr.f32.mxu0 0.0
        %2112 = vmatmul.mubr.f32.gmra.mrb[0].mxu0 %v1970
        %v2113 = vpop.f32.mrb[0].mxu0
        %v2114 = vadd.f32 0.0, %v2113
        %v2115 = vpop.f32.mrb[0].mxu0
        %2116 = vmatprep.mubr.f32.mxu0 0.0
        %2117 = vmatmul.mubr.f32.gmra.mrb[0].mxu0 %v1973
        %v2118 = vpop.f32.mrb[0].mxu0
        %v2119 = vadd.f32 0.0, %v2118
        %v2120 = vpop.f32.mrb[0].mxu0
        %2121 = vmatprep.mubr.f32.mxu0 0.0
        %2122 = vmatmul.mubr.f32.gmra.mrb[0].mxu0 %v1976
        %v2123 = vpop.f32.mrb[0].mxu0
        %v2124 = vadd.f32 0.0, %v2123
        %v2125 = vpop.f32.mrb[0].mxu0
        %2126 = vdwg.mxu0
        %v2127 = vmul.f32 %v1912, %v2049
        %v2128 = vmul.f32 %v1913, %v2054
        %v2129 = vmul.f32 %v1914, %v2059
        %v2130 = vmul.f32 %v1915, %v2064
        %v2131 = vmul.f32 %v1916, %v2069
        %v2132 = vmul.f32 %v1917, %v2074
        %v2133 = vmul.f32 %v1918, %v2079
        %v2134 = vmul.f32 %v1919, %v2084
        %v2135 = vmul.f32 %v1920, %v2089
        %v2136 = vmul.f32 %v1921, %v2094
        %v2137 = vmul.f32 %v1922, %v2099
        %v2138 = vmul.f32 %v1923, %v2104
        %v2139 = vmul.f32 %v1924, %v2109
        %v2140 = vmul.f32 %v1925, %v2114
        %v2141 = vmul.f32 %v1926, %v2119
        %v2142 = vmul.f32 %v1927, %v2124
        %v2143 = vld [vmem:[%s6] sm:$0xff]
        %v2144 = vld [vmem:[%s6 + $0x8] sm:$0xff]
        %v2145 = vld [vmem:[%s6 + $0x10] sm:$0xff]
        %v2146 = vld [vmem:[%s6 + $0x18] sm:$0xff]
        %v2147 = vld [vmem:[%s6 + $0x20] sm:$0xff]
        %v2148 = vld [vmem:[%s6 + $0x28] sm:$0xff]
        %v2149 = vld [vmem:[%s6 + $0x30] sm:$0xff]
        %v2150 = vld [vmem:[%s6 + $0x38] sm:$0xff]
        %v2151 = vld [vmem:[%s6 + $0x40] sm:$0xff]
        %v2152 = vld [vmem:[%s6 + $0x48] sm:$0xff]
        %v2153 = vld [vmem:[%s6 + $0x50] sm:$0xff]
        %v2154 = vld [vmem:[%s6 + $0x58] sm:$0xff]
        %v2155 = vld [vmem:[%s6 + $0x60] sm:$0xff]
        %v2156 = vld [vmem:[%s6 + $0x68] sm:$0xff]
        %v2157 = vld [vmem:[%s6 + $0x70] sm:$0xff]
        %v2158 = vld [vmem:[%s6 + $0x78] sm:$0xff]
        %2159 = vmatprep.subr.mxu0 0.0
        %2160 = vmatpush1.msra.mxu0 %v2143
        %2161 = vmatprep.subr.mxu0 0.0
        %2162 = vmatpush1.msra.mxu0 %v2144
        %2163 = vmatprep.subr.mxu0 0.0
        %2164 = vmatpush1.msra.mxu0 %v2145
        %2165 = vmatprep.subr.mxu0 0.0
        %2166 = vmatpush1.msra.mxu0 %v2146
        %2167 = vmatprep.subr.mxu0 0.0
        %2168 = vmatpush1.msra.mxu0 %v2147
        %2169 = vmatprep.subr.mxu0 0.0
        %2170 = vmatpush1.msra.mxu0 %v2148
        %2171 = vmatprep.subr.mxu0 0.0
        %2172 = vmatpush1.msra.mxu0 %v2149
        %2173 = vmatprep.subr.mxu0 0.0
        %2174 = vmatpush1.msra.mxu0 %v2150
        %2175 = vmatprep.subr.mxu0 0.0
        %2176 = vmatpush1.msra.mxu0 %v2151
        %2177 = vmatprep.subr.mxu0 0.0
        %2178 = vmatpush1.msra.mxu0 %v2152
        %2179 = vmatprep.subr.mxu0 0.0
        %2180 = vmatpush1.msra.mxu0 %v2153
        %2181 = vmatprep.subr.mxu0 0.0
        %2182 = vmatpush1.msra.mxu0 %v2154
        %2183 = vmatprep.subr.mxu0 0.0
        %2184 = vmatpush1.msra.mxu0 %v2155
        %2185 = vmatprep.subr.mxu0 0.0
        %2186 = vmatpush1.msra.mxu0 %v2156
        %2187 = vmatprep.subr.mxu0 0.0
        %2188 = vmatpush1.msra.mxu0 %v2157
        %2189 = vmatprep.subr.mxu0 0.0
        %2190 = vmatpush1.msra.mxu0 %v2158
        %2191 = vmatprep.subr.mxu0 0.0
        %2192 = vmatpush1.msra.mxu0 0.0
        %2193 = vmatprep.subr.mxu0 0.0
        %2194 = vmatpush1.msra.mxu0 0.0
        %2195 = vmatprep.subr.mxu0 0.0
        %2196 = vmatpush1.msra.mxu0 0.0
        %2197 = vmatprep.subr.mxu0 0.0
        %2198 = vmatpush1.msra.mxu0 0.0
        %2199 = vmatprep.subr.mxu0 0.0
        %2200 = vmatpush1.msra.mxu0 0.0
        %2201 = vmatprep.subr.mxu0 0.0
        %2202 = vmatpush1.msra.mxu0 0.0
        %2203 = vmatprep.subr.mxu0 0.0
        %2204 = vmatpush1.msra.mxu0 0.0
        %2205 = vmatprep.subr.mxu0 0.0
        %2206 = vmatpush1.msra.mxu0 0.0
        %2207 = vmatprep.subr.mxu0 0.0
        %2208 = vmatpush1.msra.mxu0 0.0
        %2209 = vmatprep.subr.mxu0 0.0
        %2210 = vmatpush1.msra.mxu0 0.0
        %2211 = vmatprep.subr.mxu0 0.0
        %2212 = vmatpush1.msra.mxu0 0.0
        %2213 = vmatprep.subr.mxu0 0.0
        %2214 = vmatpush1.msra.mxu0 0.0
        %2215 = vmatprep.subr.mxu0 0.0
        %2216 = vmatpush1.msra.mxu0 0.0
        %2217 = vmatprep.subr.mxu0 0.0
        %2218 = vmatpush1.msra.mxu0 0.0
        %2219 = vmatprep.subr.mxu0 0.0
        %2220 = vmatpush1.msra.mxu0 0.0
        %2221 = vmatprep.subr.mxu0 0.0
        %2222 = vmatpush1.msra.mxu0 0.0
        %2223 = vmatprep.mubr.f32.mxu0 0.0
        %2224 = vmatmul.mubr.f32.gmra.mrb[0].mxu0 %v2127
        %v2225 = vpop.f32.mrb[0].mxu0
        %v2226 = vadd.f32 0.0, %v2225
        %v2227 = vpop.f32.mrb[0].mxu0
        %2228 = vmatprep.mubr.f32.mxu0 0.0
        %2229 = vmatmul.mubr.f32.gmra.mrb[0].mxu0 %v2128
        %v2230 = vpop.f32.mrb[0].mxu0
        %v2231 = vadd.f32 0.0, %v2230
        %v2232 = vpop.f32.mrb[0].mxu0
        %2233 = vmatprep.mubr.f32.mxu0 0.0
        %2234 = vmatmul.mubr.f32.gmra.mrb[0].mxu0 %v2129
        %v2235 = vpop.f32.mrb[0].mxu0
        %v2236 = vadd.f32 0.0, %v2235
        %v2237 = vpop.f32.mrb[0].mxu0
        %2238 = vmatprep.mubr.f32.mxu0 0.0
        %2239 = vmatmul.mubr.f32.gmra.mrb[0].mxu0 %v2130
        %v2240 = vpop.f32.mrb[0].mxu0
        %v2241 = vadd.f32 0.0, %v2240
        %v2242 = vpop.f32.mrb[0].mxu0
        %2243 = vmatprep.mubr.f32.mxu0 0.0
        %2244 = vmatmul.mubr.f32.gmra.mrb[0].mxu0 %v2131
        %v2245 = vpop.f32.mrb[0].mxu0
        %v2246 = vadd.f32 0.0, %v2245
        %v2247 = vpop.f32.mrb[0].mxu0
        %2248 = vmatprep.mubr.f32.mxu0 0.0
        %2249 = vmatmul.mubr.f32.gmra.mrb[0].mxu0 %v2132
        %v2250 = vpop.f32.mrb[0].mxu0
        %v2251 = vadd.f32 0.0, %v2250
        %v2252 = vpop.f32.mrb[0].mxu0
        %2253 = vmatprep.mubr.f32.mxu0 0.0
        %2254 = vmatmul.mubr.f32.gmra.mrb[0].mxu0 %v2133
        %v2255 = vpop.f32.mrb[0].mxu0
        %v2256 = vadd.f32 0.0, %v2255
        %v2257 = vpop.f32.mrb[0].mxu0
        %2258 = vmatprep.mubr.f32.mxu0 0.0
        %2259 = vmatmul.mubr.f32.gmra.mrb[0].mxu0 %v2134
        %v2260 = vpop.f32.mrb[0].mxu0
        %v2261 = vadd.f32 0.0, %v2260
        %v2262 = vpop.f32.mrb[0].mxu0
        %2263 = vmatprep.mubr.f32.mxu0 0.0
        %2264 = vmatmul.mubr.f32.gmra.mrb[0].mxu0 %v2135
        %v2265 = vpop.f32.mrb[0].mxu0
        %v2266 = vadd.f32 0.0, %v2265
        %v2267 = vpop.f32.mrb[0].mxu0
        %2268 = vmatprep.mubr.f32.mxu0 0.0
        %2269 = vmatmul.mubr.f32.gmra.mrb[0].mxu0 %v2136
        %v2270 = vpop.f32.mrb[0].mxu0
        %v2271 = vadd.f32 0.0, %v2270
        %v2272 = vpop.f32.mrb[0].mxu0
        %2273 = vmatprep.mubr.f32.mxu0 0.0
        %2274 = vmatmul.mubr.f32.gmra.mrb[0].mxu0 %v2137
        %v2275 = vpop.f32.mrb[0].mxu0
        %v2276 = vadd.f32 0.0, %v2275
        %v2277 = vpop.f32.mrb[0].mxu0
        %2278 = vmatprep.mubr.f32.mxu0 0.0
        %2279 = vmatmul.mubr.f32.gmra.mrb[0].mxu0 %v2138
        %v2280 = vpop.f32.mrb[0].mxu0
        %v2281 = vadd.f32 0.0, %v2280
        %v2282 = vpop.f32.mrb[0].mxu0
        %2283 = vmatprep.mubr.f32.mxu0 0.0
        %2284 = vmatmul.mubr.f32.gmra.mrb[0].mxu0 %v2139
        %v2285 = vpop.f32.mrb[0].mxu0
        %v2286 = vadd.f32 0.0, %v2285
        %v2287 = vpop.f32.mrb[0].mxu0
        %2288 = vmatprep.mubr.f32.mxu0 0.0
        %2289 = vmatmul.mubr.f32.gmra.mrb[0].mxu0 %v2140
        %v2290 = vpop.f32.mrb[0].mxu0
        %v2291 = vadd.f32 0.0, %v2290
        %v2292 = vpop.f32.mrb[0].mxu0
        %2293 = vmatprep.mubr.f32.mxu0 0.0
        %2294 = vmatmul.mubr.f32.gmra.mrb[0].mxu0 %v2141
        %v2295 = vpop.f32.mrb[0].mxu0
        %v2296 = vadd.f32 0.0, %v2295
        %v2297 = vpop.f32.mrb[0].mxu0
        %2298 = vmatprep.mubr.f32.mxu0 0.0
        %2299 = vmatmul.mubr.f32.gmra.mrb[0].mxu0 %v2142
        %v2300 = vpop.f32.mrb[0].mxu0
        %v2301 = vadd.f32 0.0, %v2300
        %v2302 = vpop.f32.mrb[0].mxu0
        %2303 = vdwg.mxu0
        %vm2304 = vcmp.eq.s32.totalorder %v384, 127
        %v2305 = vsel %vm2304, 1.0, %v2226
        %v2306 = vsel %vm2304, 1.0, %v2231
        %v2307 = vsel %vm2304, 1.0, %v2236
        %v2308 = vsel %vm2304, 1.0, %v2241
        %v2309 = vsel %vm2304, 1.0, %v2246
        %v2310 = vsel %vm2304, 1.0, %v2251
        %v2311 = vsel %vm2304, 1.0, %v2256
        %v2312 = vsel %vm2304, 1.0, %v2261
        %v2313 = vsel %vm2304, 1.0, %v2266
        %v2314 = vsel %vm2304, 1.0, %v2271
        %v2315 = vsel %vm2304, 1.0, %v2276
        %v2316 = vsel %vm2304, 1.0, %v2281
        %v2317 = vsel %vm2304, 1.0, %v2286
        %v2318 = vsel %vm2304, 1.0, %v2291
        %v2319 = vsel %vm2304, 1.0, %v2296
        %v2320 = vsel %vm2304, 1.0, %v2301
        %v2321 = vlaneseq
        %v2322 = vshrl.u32 %v2321, 7
        %v2323 = vadd.s32 %v2322, 8
        %v2324 = vadd.s32 %v2322, 16
        %v2325 = vadd.s32 %v2322, 24
        %v2326 = vadd.s32 %v2322, 32
        %v2327 = vadd.s32 %v2322, 40
        %v2328 = vadd.s32 %v2322, 48
        %v2329 = vadd.s32 %v2322, 56
        %v2330 = vlaneseq
        %v2331 = vshrl.u32 %v2330, 7
        %v2332 = vsub.s32 0, %v2331
        %v2333 = vrot.slane %v366, %v2332
        %vm2334 = vcmp.eq.s32.totalorder %v2322, %v2333
        %vm2335 = vcmp.eq.s32.totalorder %v2323, %v2333
        %vm2336 = vcmp.eq.s32.totalorder %v2324, %v2333
        %vm2337 = vcmp.eq.s32.totalorder %v2325, %v2333
        %vm2338 = vcmp.eq.s32.totalorder %v2326, %v2333
        %vm2339 = vcmp.eq.s32.totalorder %v2327, %v2333
        %vm2340 = vcmp.eq.s32.totalorder %v2328, %v2333
        %vm2341 = vcmp.eq.s32.totalorder %v2329, %v2333
        %v2342 = vsel %vm2334, 1, 0
        %v2343 = vsel %vm2335, 1, 0
        %v2344 = vsel %vm2336, 1, 0
        %v2345 = vsel %vm2337, 1, 0
        %v2346 = vsel %vm2338, 1, 0
        %v2347 = vsel %vm2339, 1, 0
        %v2348 = vsel %vm2340, 1, 0
        %v2349 = vsel %vm2341, 1, 0
        %v2350 = vcvt.s32.f32 %v2342
        %v2351 = vcvt.s32.f32 %v2343
        %v2352 = vcvt.s32.f32 %v2344
        %v2353 = vcvt.s32.f32 %v2345
        %v2354 = vcvt.s32.f32 %v2346
        %v2355 = vcvt.s32.f32 %v2347
        %v2356 = vcvt.s32.f32 %v2348
        %v2357 = vcvt.s32.f32 %v2349
        %v2358 = vld [vmem:[#allocation2] sm:$0xff]
        %v2359 = vld [vmem:[#allocation2 + $0x8] sm:$0xff]
        %v2360 = vld [vmem:[#allocation2 + $0x10] sm:$0xff]
        %v2361 = vld [vmem:[#allocation2 + $0x18] sm:$0xff]
        %v2362 = vld [vmem:[#allocation2 + $0x20] sm:$0xff]
        %v2363 = vld [vmem:[#allocation2 + $0x28] sm:$0xff]
        %v2364 = vld [vmem:[#allocation2 + $0x30] sm:$0xff]
        %v2365 = vld [vmem:[#allocation2 + $0x38] sm:$0xff]
        %2366 = vmatprep.subr.mxu0 0.0
        %2367 = vmatpush1.msra.mxu0 %v2305
        %2368 = vmatprep.subr.mxu0 0.0
        %2369 = vmatpush1.msra.mxu0 %v2306
        %2370 = vmatprep.subr.mxu0 0.0
        %2371 = vmatpush1.msra.mxu0 %v2307
        %2372 = vmatprep.subr.mxu0 0.0
        %2373 = vmatpush1.msra.mxu0 %v2308
        %2374 = vmatprep.subr.mxu0 0.0
        %2375 = vmatpush1.msra.mxu0 %v2309
        %2376 = vmatprep.subr.mxu0 0.0
        %2377 = vmatpush1.msra.mxu0 %v2310
        %2378 = vmatprep.subr.mxu0 0.0
        %2379 = vmatpush1.msra.mxu0 %v2311
        %2380 = vmatprep.subr.mxu0 0.0
        %2381 = vmatpush1.msra.mxu0 %v2312
        %2382 = vmatprep.subr.mxu0 0.0
        %2383 = vmatpush1.msra.mxu0 %v2313
        %2384 = vmatprep.subr.mxu0 0.0
        %2385 = vmatpush1.msra.mxu0 %v2314
        %2386 = vmatprep.subr.mxu0 0.0
        %2387 = vmatpush1.msra.mxu0 %v2315
        %2388 = vmatprep.subr.mxu0 0.0
        %2389 = vmatpush1.msra.mxu0 %v2316
        %2390 = vmatprep.subr.mxu0 0.0
        %2391 = vmatpush1.msra.mxu0 %v2317
        %2392 = vmatprep.subr.mxu0 0.0
        %2393 = vmatpush1.msra.mxu0 %v2318
        %2394 = vmatprep.subr.mxu0 0.0
        %2395 = vmatpush1.msra.mxu0 %v2319
        %2396 = vmatprep.subr.mxu0 0.0
        %2397 = vmatpush1.msra.mxu0 %v2320
        %2398 = vmatprep.subr.mxu0 0.0
        %2399 = vmatpush1.msra.mxu0 0.0
        %2400 = vmatprep.subr.mxu0 0.0
        %2401 = vmatpush1.msra.mxu0 0.0
        %2402 = vmatprep.subr.mxu0 0.0
        %2403 = vmatpush1.msra.mxu0 0.0
        %2404 = vmatprep.subr.mxu0 0.0
        %2405 = vmatpush1.msra.mxu0 0.0
        %2406 = vmatprep.subr.mxu0 0.0
        %2407 = vmatpush1.msra.mxu0 0.0
        %2408 = vmatprep.subr.mxu0 0.0
        %2409 = vmatpush1.msra.mxu0 0.0
        %2410 = vmatprep.subr.mxu0 0.0
        %2411 = vmatpush1.msra.mxu0 0.0
        %2412 = vmatprep.subr.mxu0 0.0
        %2413 = vmatpush1.msra.mxu0 0.0
        %2414 = vmatprep.subr.mxu0 0.0
        %2415 = vmatpush1.msra.mxu0 0.0
        %2416 = vmatprep.subr.mxu0 0.0
        %2417 = vmatpush1.msra.mxu0 0.0
        %2418 = vmatprep.subr.mxu0 0.0
        %2419 = vmatpush1.msra.mxu0 0.0
        %2420 = vmatprep.subr.mxu0 0.0
        %2421 = vmatpush1.msra.mxu0 0.0
        %2422 = vmatprep.subr.mxu0 0.0
        %2423 = vmatpush1.msra.mxu0 0.0
        %2424 = vmatprep.subr.mxu0 0.0
        %2425 = vmatpush1.msra.mxu0 0.0
        %2426 = vmatprep.subr.mxu0 0.0
        %2427 = vmatpush1.msra.mxu0 0.0
        %2428 = vmatprep.subr.mxu0 0.0
        %2429 = vmatpush1.msra.mxu0 0.0
        %2430 = vmatprep.mubr.f32.mxu0 0.0
        %2431 = vmatmul.mubr.f32.gmra.mrb[0].mxu0 %v2350
        %v2432 = vpop.f32.mrb[0].mxu0
        %v2433 = vadd.f32 0.0, %v2432
        %v2434 = vpop.f32.mrb[0].mxu0
        %2435 = vmatprep.mubr.f32.mxu0 0.0
        %2436 = vmatmul.mubr.f32.gmra.mrb[0].mxu0 %v2351
        %v2437 = vpop.f32.mrb[0].mxu0
        %v2438 = vadd.f32 0.0, %v2437
        %v2439 = vpop.f32.mrb[0].mxu0
        %2440 = vmatprep.mubr.f32.mxu0 0.0
        %2441 = vmatmul.mubr.f32.gmra.mrb[0].mxu0 %v2352
        %v2442 = vpop.f32.mrb[0].mxu0
        %v2443 = vadd.f32 0.0, %v2442
        %v2444 = vpop.f32.mrb[0].mxu0
        %2445 = vmatprep.mubr.f32.mxu0 0.0
        %2446 = vmatmul.mubr.f32.gmra.mrb[0].mxu0 %v2353
        %v2447 = vpop.f32.mrb[0].mxu0
        %v2448 = vadd.f32 0.0, %v2447
        %v2449 = vpop.f32.mrb[0].mxu0
        %2450 = vmatprep.mubr.f32.mxu0 0.0
        %2451 = vmatmul.mubr.f32.gmra.mrb[0].mxu0 %v2354
        %v2452 = vpop.f32.mrb[0].mxu0
        %v2453 = vadd.f32 0.0, %v2452
        %v2454 = vpop.f32.mrb[0].mxu0
        %2455 = vmatprep.mubr.f32.mxu0 0.0
        %2456 = vmatmul.mubr.f32.gmra.mrb[0].mxu0 %v2355
        %v2457 = vpop.f32.mrb[0].mxu0
        %v2458 = vadd.f32 0.0, %v2457
        %v2459 = vpop.f32.mrb[0].mxu0
        %2460 = vmatprep.mubr.f32.mxu0 0.0
        %2461 = vmatmul.mubr.f32.gmra.mrb[0].mxu0 %v2356
        %v2462 = vpop.f32.mrb[0].mxu0
        %v2463 = vadd.f32 0.0, %v2462
        %v2464 = vpop.f32.mrb[0].mxu0
        %2465 = vmatprep.mubr.f32.mxu0 0.0
        %2466 = vmatmul.mubr.f32.gmra.mrb[0].mxu0 %v2357
        %v2467 = vpop.f32.mrb[0].mxu0
        %v2468 = vadd.f32 0.0, %v2467
        %v2469 = vpop.f32.mrb[0].mxu0
        %2470 = vdwg.mxu0
        %v2471 = vadd.f32 %v2358, %v2433
        %v2472 = vadd.f32 %v2359, %v2438
        %v2473 = vadd.f32 %v2360, %v2443
        %v2474 = vadd.f32 %v2361, %v2448
        %v2475 = vadd.f32 %v2362, %v2453
        %v2476 = vadd.f32 %v2363, %v2458
        %v2477 = vadd.f32 %v2364, %v2463
        %v2478 = vadd.f32 %v2365, %v2468
        %2479 = vst [vmem:[#allocation2] sm:$0xff] %v2471
        %2480 = vst [vmem:[#allocation2 + $0x8] sm:$0xff] %v2472
        %2481 = vst [vmem:[#allocation2 + $0x10] sm:$0xff] %v2473
        %2482 = vst [vmem:[#allocation2 + $0x18] sm:$0xff] %v2474
        %2483 = vst [vmem:[#allocation2 + $0x20] sm:$0xff] %v2475
        %2484 = vst [vmem:[#allocation2 + $0x28] sm:$0xff] %v2476
        %2485 = vst [vmem:[#allocation2 + $0x30] sm:$0xff] %v2477
        %2486 = vst [vmem:[#allocation2 + $0x38] sm:$0xff] %v2478
        %p2487 = scmp.eq.s32.totalorder %s20, 2
        // Predicated region
        $region57: #{tpu_custom_call.1} parent=51 // pred_check
          %p2488 = pneg %p2487
        $region58: #{tpu_custom_call.1} parent=51 // pred_check_branch
          %2490 = sbr.rel (%p2488) target = $region60
        $region59: #{tpu_custom_call.1} parent=51 // pred_region
          %v2491 = vmax.f32 %v2471, 1.0
          %v2492 = vmax.f32 %v2472, 1.0
          %v2493 = vmax.f32 %v2473, 1.0
          %v2494 = vmax.f32 %v2474, 1.0
          %v2495 = vmax.f32 %v2475, 1.0
          %v2496 = vmax.f32 %v2476, 1.0
          %v2497 = vmax.f32 %v2477, 1.0
          %v2498 = vmax.f32 %v2478, 1.0
          %v2499 = vrcp.pop %v2491
          %v2500 = vrcp.pop %v2492
          %v2501 = vrcp.pop %v2493
          %v2502 = vrcp.pop %v2494
          %v2503 = vrcp.pop %v2495
          %v2504 = vrcp.pop %v2496
          %v2505 = vrcp.pop %v2497
          %v2506 = vrcp.pop %v2498
          %2508 = vset.pattern.permute.xlu0 127
          %2509 = vperm.xlu0 %2508, %v2499
          %v2510 = vpop.permute.xlu0 %2509
          %2513 = vset.pattern.permute.xlu0 127
          %2514 = vperm.xlu0 %2513, %v2500
          %v2515 = vpop.permute.xlu0 %2514
          %2518 = vset.pattern.permute.xlu0 127
          %2519 = vperm.xlu0 %2518, %v2501
          %v2520 = vpop.permute.xlu0 %2519
          %2523 = vset.pattern.permute.xlu0 127
          %2524 = vperm.xlu0 %2523, %v2502
          %v2525 = vpop.permute.xlu0 %2524
          %2528 = vset.pattern.permute.xlu0 127
          %2529 = vperm.xlu0 %2528, %v2503
          %v2530 = vpop.permute.xlu0 %2529
          %2533 = vset.pattern.permute.xlu0 127
          %2534 = vperm.xlu0 %2533, %v2504
          %v2535 = vpop.permute.xlu0 %2534
          %2538 = vset.pattern.permute.xlu0 127
          %2539 = vperm.xlu0 %2538, %v2505
          %v2540 = vpop.permute.xlu0 %2539
          %2543 = vset.pattern.permute.xlu0 127
          %2544 = vperm.xlu0 %2543, %v2506
          %v2545 = vpop.permute.xlu0 %2544
          %v2547 = vmul.f32 %v2471, %v2510
          %v2548 = vmul.f32 %v2472, %v2515
          %v2549 = vmul.f32 %v2473, %v2520
          %v2550 = vmul.f32 %v2474, %v2525
          %v2551 = vmul.f32 %v2475, %v2530
          %v2552 = vmul.f32 %v2476, %v2535
          %v2553 = vmul.f32 %v2477, %v2540
          %v2554 = vmul.f32 %v2478, %v2545
          %v2555 = vld [vmem:[%s7] sm:$0x7]
          %v2557 = vsel %vm1929, %v342, 0
          %v2560 = vsel %vm1929, %v343, 0
          %v2563 = vsel %vm1929, %v344, 0
          %v2566 = vsel %vm1929, %v345, 0
          %v2569 = vsel %vm1929, %v346, 0
          %v2572 = vsel %vm1929, %v347, 0
          %v2575 = vsel %vm1929, %v348, 0
          %v2578 = vsel %vm1929, %v349, 0
          %v2581 = vsel %vm1978, %v2555, 0
          %2583 = vmatprep.subr.mxu0 0.0
          %2584 = vmatpush1.msra.mxu0 %v2581
          %2585 = vmatprep.subr.mxu0 0.0
          %2586 = vmatpush1.msra.mxu0 0.0
          %2587 = vmatprep.subr.mxu0 0.0
          %2588 = vmatpush1.msra.mxu0 0.0
          %2589 = vmatprep.subr.mxu0 0.0
          %2590 = vmatpush1.msra.mxu0 0.0
          %2591 = vmatprep.subr.mxu0 0.0
          %2592 = vmatpush1.msra.mxu0 0.0
          %2593 = vmatprep.subr.mxu0 0.0
          %2594 = vmatpush1.msra.mxu0 0.0
          %2595 = vmatprep.subr.mxu0 0.0
          %2596 = vmatpush1.msra.mxu0 0.0
          %2597 = vmatprep.subr.mxu0 0.0
          %2598 = vmatpush1.msra.mxu0 0.0
          %2599 = vmatprep.subr.mxu0 0.0
          %2600 = vmatpush1.msra.mxu0 0.0
          %2601 = vmatprep.subr.mxu0 0.0
          %2602 = vmatpush1.msra.mxu0 0.0
          %2603 = vmatprep.subr.mxu0 0.0
          %2604 = vmatpush1.msra.mxu0 0.0
          %2605 = vmatprep.subr.mxu0 0.0
          %2606 = vmatpush1.msra.mxu0 0.0
          %2607 = vmatprep.subr.mxu0 0.0
          %2608 = vmatpush1.msra.mxu0 0.0
          %2609 = vmatprep.subr.mxu0 0.0
          %2610 = vmatpush1.msra.mxu0 0.0
          %2611 = vmatprep.subr.mxu0 0.0
          %2612 = vmatpush1.msra.mxu0 0.0
          %2613 = vmatprep.subr.mxu0 0.0
          %2614 = vmatpush1.msra.mxu0 0.0
          %2615 = vmatprep.subr.mxu0 0.0
          %2616 = vmatpush1.msra.mxu0 0.0
          %2617 = vmatprep.subr.mxu0 0.0
          %2618 = vmatpush1.msra.mxu0 0.0
          %2619 = vmatprep.subr.mxu0 0.0
          %2620 = vmatpush1.msra.mxu0 0.0
          %2621 = vmatprep.subr.mxu0 0.0
          %2622 = vmatpush1.msra.mxu0 0.0
          %2623 = vmatprep.subr.mxu0 0.0
          %2624 = vmatpush1.msra.mxu0 0.0
          %2625 = vmatprep.subr.mxu0 0.0
          %2626 = vmatpush1.msra.mxu0 0.0
          %2627 = vmatprep.subr.mxu0 0.0
          %2628 = vmatpush1.msra.mxu0 0.0
          %2629 = vmatprep.subr.mxu0 0.0
          %2630 = vmatpush1.msra.mxu0 0.0
          %2631 = vmatprep.subr.mxu0 0.0
          %2632 = vmatpush1.msra.mxu0 0.0
          %2633 = vmatprep.subr.mxu0 0.0
          %2634 = vmatpush1.msra.mxu0 0.0
          %2635 = vmatprep.subr.mxu0 0.0
          %2636 = vmatpush1.msra.mxu0 0.0
          %2637 = vmatprep.subr.mxu0 0.0
          %2638 = vmatpush1.msra.mxu0 0.0
          %2639 = vmatprep.subr.mxu0 0.0
          %2640 = vmatpush1.msra.mxu0 0.0
          %2641 = vmatprep.subr.mxu0 0.0
          %2642 = vmatpush1.msra.mxu0 0.0
          %2643 = vmatprep.subr.mxu0 0.0
          %2644 = vmatpush1.msra.mxu0 0.0
          %2645 = vmatprep.subr.mxu0 0.0
          %2646 = vmatpush1.msra.mxu0 0.0
          %2647 = vmatprep.mubr.f32.mxu0 0.0
          %2648 = vmatmul.mubr.f32.gmra.mrb[0].mxu0 %v2557
          %v2649 = vpop.f32.mrb[0].mxu0
          %v2650 = vadd.f32 0.0, %v2649
          %v2651 = vpop.f32.mrb[0].mxu0
          %2652 = vmatprep.mubr.f32.mxu0 0.0
          %2653 = vmatmul.mubr.f32.gmra.mrb[0].mxu0 %v2560
          %v2654 = vpop.f32.mrb[0].mxu0
          %v2655 = vadd.f32 0.0, %v2654
          %v2656 = vpop.f32.mrb[0].mxu0
          %2657 = vmatprep.mubr.f32.mxu0 0.0
          %2658 = vmatmul.mubr.f32.gmra.mrb[0].mxu0 %v2563
          %v2659 = vpop.f32.mrb[0].mxu0
          %v2660 = vadd.f32 0.0, %v2659
          %v2661 = vpop.f32.mrb[0].mxu0
          %2662 = vmatprep.mubr.f32.mxu0 0.0
          %2663 = vmatmul.mubr.f32.gmra.mrb[0].mxu0 %v2566
          %v2664 = vpop.f32.mrb[0].mxu0
          %v2665 = vadd.f32 0.0, %v2664
          %v2666 = vpop.f32.mrb[0].mxu0
          %2667 = vmatprep.mubr.f32.mxu0 0.0
          %2668 = vmatmul.mubr.f32.gmra.mrb[0].mxu0 %v2569
          %v2669 = vpop.f32.mrb[0].mxu0
          %v2670 = vadd.f32 0.0, %v2669
          %v2671 = vpop.f32.mrb[0].mxu0
          %2672 = vmatprep.mubr.f32.mxu0 0.0
          %2673 = vmatmul.mubr.f32.gmra.mrb[0].mxu0 %v2572
          %v2674 = vpop.f32.mrb[0].mxu0
          %v2675 = vadd.f32 0.0, %v2674
          %v2676 = vpop.f32.mrb[0].mxu0
          %2677 = vmatprep.mubr.f32.mxu0 0.0
          %2678 = vmatmul.mubr.f32.gmra.mrb[0].mxu0 %v2575
          %v2679 = vpop.f32.mrb[0].mxu0
          %v2680 = vadd.f32 0.0, %v2679
          %v2681 = vpop.f32.mrb[0].mxu0
          %2682 = vmatprep.mubr.f32.mxu0 0.0
          %2683 = vmatmul.mubr.f32.gmra.mrb[0].mxu0 %v2578
          %v2684 = vpop.f32.mrb[0].mxu0
          %v2685 = vadd.f32 0.0, %v2684
          %v2686 = vpop.f32.mrb[0].mxu0
          %2687 = vdwg.mxu0
          %v2688 = vadd.f32 %v2547, %v2650
          %v2689 = vadd.f32 %v2548, %v2655
          %v2690 = vadd.f32 %v2549, %v2660
          %v2691 = vadd.f32 %v2550, %v2665
          %v2692 = vadd.f32 %v2551, %v2670
          %v2693 = vadd.f32 %v2552, %v2675
          %v2694 = vadd.f32 %v2553, %v2680
          %v2695 = vadd.f32 %v2554, %v2685
          %2696 = vst [vmem:[#allocation2] sm:$0xff] %v2688
          %2697 = vst [vmem:[#allocation2 + $0x8] sm:$0xff] %v2689
          %2698 = vst [vmem:[#allocation2 + $0x10] sm:$0xff] %v2690
          %2699 = vst [vmem:[#allocation2 + $0x18] sm:$0xff] %v2691
          %2700 = vst [vmem:[#allocation2 + $0x20] sm:$0xff] %v2692
          %2701 = vst [vmem:[#allocation2 + $0x28] sm:$0xff] %v2693
          %2702 = vst [vmem:[#allocation2 + $0x30] sm:$0xff] %v2694
          %2703 = vst [vmem:[#allocation2 + $0x38] sm:$0xff] %v2695
        $region60: #{tpu_custom_call.1} parent=51 // pred_fallthru
          _
        // Predicated region
        $region61: #{tpu_custom_call.1} parent=51 // pred_check
          %p2704 = pneg %p216
        $region62: #{tpu_custom_call.1} parent=51 // pred_check_branch
          %2706 = sbr.rel (%p2704) target = $region64
        $region63: #{tpu_custom_call.1} parent=51 // pred_region
          %s2708 = ssub.s32 1024, 1024
          %2709 = vsyncadd [#allocation3], %s2708
          %s2710 = sshll.u32 [#allocation2], 4
          %s2711 = int_to_ptr.vmem [resolvable:$true] %s2710
          %2716 = dma.vmem_to_hbm [thread:$0]  %s2711, 1024, %s8, [#allocation3], 128, 128, 8
        $region64: #{tpu_custom_call.1} parent=51 // pred_fallthru
          _
        // Predicated region
        $region65: #{tpu_custom_call.1} parent=51 // pred_check
          %p2717 = pneg %p216
        $region66: #{tpu_custom_call.1} parent=51 // pred_check_branch
          %2719 = sbr.rel (%p2717) target = $region68
        $region67: #{tpu_custom_call.1} parent=51 // pred_region
          %2720 = dma.done [#allocation3], 1024
        $region68: #{tpu_custom_call.1} parent=51 // pred_fallthru
          _
      $region52: #{tpu_custom_call.1} parent=5 // pred_fallthru
        _
      %p2721 = scmp.le.s32.totalorder 2, %s15
      // Predicated region
      $region69: #{tpu_custom_call.1} parent=5 // pred_check
        %p2722 = pneg %p2721
      $region70: #{tpu_custom_call.1} parent=5 // pred_check_branch
        %2724 = sbr.rel (%p2722) target = $region72
      $region71: #{tpu_custom_call.1} parent=5 // pred_region
        %s2725 = ssub.s32 %s15, 2
      $region72: #{tpu_custom_call.1} parent=5 // pred_fallthru
        _
    $region6: #{tpu_custom_call.1} parent=1 // loop_footer
      %s19 = sadd.s32 1, %s15
    $region7: #{tpu_custom_call.1} parent=1 // loop_footer_branch
      %14 = sbr.rel target = $region3
    $region8: #{tpu_custom_call.1} parent=1 // loop_exit
      _
    %2726 = vsyncpa [#allocation3], 1
    %s2727 = scalar_lea.sflag [#allocation3], 1
    %2728 = vsyncpa %s2727, 1

</llo_original>
